<compile_context>
chip_gen: v5e
topology: v5e:2x2
jax: 0.10.0
libtpu: 0.0.40
codegen_flags: <defaults>
</compile_context>

<pallas_src>
import jax
import jax.numpy as jnp
from jax.experimental import pallas as pl
from jax.experimental.pallas import tpu as pltpu

SEQ = 30          # sequence_length  -> conv "W" axis after the torch reshape
FEAT = 14         # FD_feature_columns -> conv "H" axis after the torch reshape
BN_EPS = 1e-5

# (Cin, Cout, K, pad, Hin) per conv layer; Hin of layer l+1 == Hout of layer l
LAYERS = [
    (1, 10, 10, 5, FEAT),   # -> Hout 15
    (10, 10, 10, 5, 15),    # -> 16
    (10, 10, 10, 5, 16),    # -> 17
    (10, 10, 10, 5, 17),    # -> 18
    (10, 1, 3, 1, 18),      # -> 18
]
H_FINAL = LAYERS[-1][4] + 2 * LAYERS[-1][3] - LAYERS[-1][2] + 1   # 18
FLAT = 1 * H_FINAL * SEQ                                          # 540
HID = 100
HID_PAD = 128     # dense hidden padded to one full lane-width
OUT_PAD = 128     # dense-2 output stored as a lane-dense 128-wide slab
TB_MAX = 16       # batch elements packed along lanes per grid step


# ---------------------------------------------------------------------------
# Pallas kernels
# ---------------------------------------------------------------------------
def _conv_stack_kernel(x_ref, w1, b1, w2, b2, w3, b3, w4, b4, w5, b5, out_ref):
    """All 5 conv+BN+tanh layers for one block of TB batch elements.

    Activations are (Cin*Hin, TB*SEQ): channel-major rows, batch packed along
    lanes.  Zero padding is folded into the Toeplitz weights, so each layer is
    one matmul + bias + tanh.
    """
    act = x_ref[0]                                          # (FEAT, TB*SEQ)
    for w_ref, b_ref in ((w1, b1), (w2, b2), (w3, b3), (w4, b4), (w5, b5)):
        act = jnp.tanh(
            jnp.dot(w_ref[...], act, preferred_element_type=jnp.float32)
            + b_ref[...])
    out_ref[0] = act                                        # (H_FINAL, TB*SEQ)


def _dense_kernel(x_ref, w1_ref, b1_ref, w2_ref, b2_ref, out_ref):
    """Dense1 (tanh) + Dense2 for a block of TD batch rows.

    The final (.,HID)@(HID,1) matvec is a VPU multiply + lane reduction; the
    scalar result is broadcast into a lane-dense (TD, OUT_PAD) output slab.
    """
    d1 = jnp.tanh(
        jnp.dot(x_ref[...], w1_ref[...], preferred_element_type=jnp.float32)
        + b1_ref[...])                                      # (TD, HID_PAD)
    d2 = jnp.sum(d1 * w2_ref[...], axis=-1, keepdims=True) + b2_ref[...]
    out_ref[...] = jnp.broadcast_to(d2, out_ref.shape)      # lane-dense store


# ---------------------------------------------------------------------------
# pallas_call wrappers
# ---------------------------------------------------------------------------
def _full_spec(arr):
    return pl.BlockSpec(arr.shape, lambda i, n=arr.ndim: (0,) * n)


def conv_stack(x_packed, conv_ops):
    nb, _, lanes = x_packed.shape
    in_specs = [pl.BlockSpec((1, FEAT, lanes), lambda b: (b, 0, 0))]
    in_specs += [_full_spec(a) for a in conv_ops]
    return pl.pallas_call(
        _conv_stack_kernel,
        out_shape=jax.ShapeDtypeStruct((nb, H_FINAL, lanes), jnp.float32),
        grid_spec=pltpu.PrefetchScalarGridSpec(
            num_scalar_prefetch=0,
            grid=(nb,),
            in_specs=in_specs,
            out_specs=pl.BlockSpec((1, H_FINAL, lanes), lambda b: (b, 0, 0))),
        compiler_params=pltpu.CompilerParams(
            dimension_semantics=("parallel",)),
    )(x_packed, *conv_ops)


def dense_head(flat, W1p, b1p, W2p, b2p, td):
    b_pad = flat.shape[0]
    nb = b_pad // td
    weights = (W1p, b1p, W2p, b2p)
    in_specs = [pl.BlockSpec((td, FLAT), lambda i: (i, 0))]
    in_specs += [_full_spec(a) for a in weights]
    return pl.pallas_call(
        _dense_kernel,
        out_shape=jax.ShapeDtypeStruct((b_pad, OUT_PAD), jnp.float32),
        grid_spec=pltpu.PrefetchScalarGridSpec(
            num_scalar_prefetch=0,
            grid=(nb,),
            in_specs=in_specs,
            out_specs=pl.BlockSpec((td, OUT_PAD), lambda i: (i, 0))),
        compiler_params=pltpu.CompilerParams(
            dimension_semantics=("parallel",)),
    )(flat, *weights)


# ---------------------------------------------------------------------------
# Glue: parameter setup / folding (plain JAX, run once per parameter set)
# ---------------------------------------------------------------------------
def make_params(key):
    keys = jax.random.split(key, 34)
    it = iter(range(34))
    conv = []
    for (cin, cout, k, pad, hin) in LAYERS:
        fan_in, fan_out = cin * k, cout * k
        std = (2.0 / (fan_in + fan_out)) ** 0.5          # xavier_normal_
        w = std * jax.random.normal(keys[next(it)], (cout, cin, k), jnp.float32)
        b = 0.1 * jax.random.normal(keys[next(it)], (cout,), jnp.float32)
        gamma = 1.0 + 0.1 * jax.random.normal(keys[next(it)], (cout,), jnp.float32)
        beta = 0.1 * jax.random.normal(keys[next(it)], (cout,), jnp.float32)
        mean = 0.05 * jax.random.normal(keys[next(it)], (cout,), jnp.float32)
        var = 1.0 + 0.2 * jax.random.uniform(keys[next(it)], (cout,), jnp.float32)
        conv.append(dict(w=w, b=b, gamma=gamma, beta=beta, mean=mean, var=var))
    std1 = (2.0 / (FLAT + HID)) ** 0.5
    W1 = std1 * jax.random.normal(keys[next(it)], (FLAT, HID), jnp.float32)
    b1 = 0.1 * jax.random.normal(keys[next(it)], (HID,), jnp.float32)
    std2 = (2.0 / (HID + 1)) ** 0.5
    W2 = std2 * jax.random.normal(keys[next(it)], (HID, 1), jnp.float32)
    b2 = 0.1 * jax.random.normal(keys[next(it)], (1,), jnp.float32)
    return dict(conv=conv, W1=W1, b1=b1, W2=W2, b2=b2)


def prepare_operands(params):
    """Fold BN + zero-padding into block-Toeplitz conv matrices and pad the
    dense head to lane-dense widths.  Pure parameter preprocessing — call it
    once per parameter set, outside the per-inference path."""
    conv_ops = []
    for p, (cin, cout, k, pad, hin) in zip(params['conv'], LAYERS):
        s = p['gamma'] / jnp.sqrt(p['var'] + BN_EPS)              # (Cout,)
        wf = p['w'] * s[:, None, None]                            # (Cout,Cin,K)
        bf = s * (p['b'] - p['mean']) + p['beta']                 # (Cout,)
        ho = hin + 2 * pad - k + 1
        h = jnp.arange(ho)[:, None, None]
        i = jnp.arange(hin)[None, :, None]
        kk = jnp.arange(k)[None, None, :]
        # Padded-row index j = i + pad must equal h + kk; the always-zero pad
        # rows are dropped from the operand entirely.
        T = ((i + pad) == (h + kk)).astype(jnp.float32)           # (Ho,Hin,K)
        Wt = jnp.einsum('ock,hik->ohci', wf, T).reshape(cout * ho, cin * hin)
        bt = jnp.repeat(bf, ho)[:, None]                          # (Cout*Ho,1)
        conv_ops += [Wt, bt]
    W1p = jnp.zeros((FLAT, HID_PAD), jnp.float32).at[:, :HID].set(params['W1'])
    b1p = jnp.zeros((1, HID_PAD), jnp.float32).at[:, :HID].set(params['b1'][None, :])
    W2p = jnp.zeros((1, HID_PAD), jnp.float32).at[:, :HID].set(params['W2'][:, 0][None, :])
    b2p = params['b2'].reshape(1, 1)
    return dict(conv=conv_ops, W1p=W1p, b1p=b1p, W2p=W2p, b2p=b2p)


# ---------------------------------------------------------------------------
# Forward pass
# ---------------------------------------------------------------------------
def cnn_rul_forward(x, ops):
    """Pallas forward.  Returns (dense2, conv5) like the PyTorch module."""
    B = x.shape[0]
    tb = min(TB_MAX, B)
    nb = -(-B // tb)
    b_pad = nb * tb
    # torch: x.reshape(-1, 1, x.size(2), x.size(1))  (a reshape, NOT a transpose)
    x_r = x.reshape(B, FEAT, SEQ)
    if b_pad != B:
        x_r = jnp.concatenate(
            [x_r, jnp.zeros((b_pad - B, FEAT, SEQ), x_r.dtype)], axis=0)
    # pack tb batch elements along the lane axis: (nb, FEAT, tb*SEQ)
    x_packed = (x_r.reshape(nb, tb, FEAT, SEQ)
                .transpose(0, 2, 1, 3)
                .reshape(nb, FEAT, tb * SEQ))
    conv_out = conv_stack(x_packed, ops['conv'])          # (nb, H_FINAL, tb*SEQ)
    # Un-pack batch from lanes and flatten per sample in torch (C=1,H,W)
    # order.  This fixed permutation runs in XLA between the two kernels:
    # conv5 is a module output and must be materialized in HBM anyway.
    conv5 = (conv_out.reshape(nb, H_FINAL, tb, SEQ)
             .transpose(0, 2, 1, 3)
             .reshape(b_pad, FLAT))
    dense2 = dense_head(conv5, ops['W1p'], ops['b1p'],
                        ops['W2p'], ops['b2p'], tb)       # (b_pad, OUT_PAD)
    return dense2[:B, :1], conv5[:B]


# ---------------------------------------------------------------------------
# Pure-JAX reference (for a correctness check)
# ---------------------------------------------------------------------------
def reference_forward(x, params):
    B = x.shape[0]
    h = x.reshape(B, 1, FEAT, SEQ)
    for p, (cin, cout, k, pad, hin) in zip(params['conv'], LAYERS):
        w4 = p['w'][:, :, :, None]                        # (Cout,Cin,K,1) OIHW
        h = jax.lax.conv_general_dilated(
            h, w4, (1, 1), ((pad, pad), (0, 0)),
            dimension_numbers=('NCHW', 'OIHW', 'NCHW'))
        h = h + p['b'][None, :, None, None]
        h = ((h - p['mean'][None, :, None, None])
             * (p['gamma'] / jnp.sqrt(p['var'] + BN_EPS))[None, :, None, None]
             + p['beta'][None, :, None, None])
        h = jnp.tanh(h)
    c5 = h.reshape(B, -1)
    d1 = jnp.tanh(c5 @ params['W1'] + params['b1'][None, :])
    d2 = d1 @ params['W2'] + params['b2'][None, :]
    return d2, c5


if __name__ == "__main__":
    key = jax.random.PRNGKey(0)
    kx, kp = jax.random.split(key)
    params = make_params(kp)
    ops = prepare_operands(params)            # hoisted: built once, not per call
    forward = jax.jit(cnn_rul_forward)

    # batch=2 (single small block) and batch=20 (exercises batch blocking +
    # padding with TB=16 -> padded to 32).
    for B in (2, 20):
        # input follows the PyTorch module: (batch, sequence_length=30, features=14)
        x = jax.random.normal(jax.random.fold_in(kx, B), (B, SEQ, FEAT), jnp.float32)
        dense2, conv5 = forward(x, ops)
        jax.block_until_ready((dense2, conv5))
        assert dense2.shape == (B, 1) and conv5.shape == (B, FLAT)
        ref_d2, ref_c5 = reference_forward(x, params)
        assert bool(jnp.allclose(conv5, ref_c5, atol=3e-2, rtol=3e-2)), "conv5 mismatch"
        assert bool(jnp.allclose(dense2, ref_d2, atol=3e-2, rtol=3e-2)), "dense2 mismatch"

    print("KERNEL_OK")
</pallas_src>

<mosaic_0001>
module attributes {stable_mosaic.version = 11 : i64} {
  func.func @_conv_stack_kernel(%arg0: i32, %arg1: memref<1x14x60xf32, #tpu.memory_space<vmem>>, %arg2: memref<150x14xf32, #tpu.memory_space<vmem>>, %arg3: memref<150x1xf32, #tpu.memory_space<vmem>>, %arg4: memref<160x150xf32, #tpu.memory_space<vmem>>, %arg5: memref<160x1xf32, #tpu.memory_space<vmem>>, %arg6: memref<170x160xf32, #tpu.memory_space<vmem>>, %arg7: memref<170x1xf32, #tpu.memory_space<vmem>>, %arg8: memref<180x170xf32, #tpu.memory_space<vmem>>, %arg9: memref<180x1xf32, #tpu.memory_space<vmem>>, %arg10: memref<18x180xf32, #tpu.memory_space<vmem>>, %arg11: memref<18x1xf32, #tpu.memory_space<vmem>>, %arg12: memref<1x18x60xf32, #tpu.memory_space<vmem>>) attributes {dimension_semantics = [#tpu.dimension_semantics<parallel>], iteration_bounds = array<i64: 1>, scalar_prefetch = 0 : i64, scratch_operands = 0 : i64, tpu.core_type = #tpu.core_type<tc>, window_params = [{transform_indices = @transform_0, window_bounds = array<i64: 1, 14, 60>}, {pipeline_mode = #tpu.pipeline_mode<synchronous>, transform_indices = @transform_1, window_bounds = array<i64: 150, 14>}, {pipeline_mode = #tpu.pipeline_mode<synchronous>, transform_indices = @transform_2, window_bounds = array<i64: 150, 1>}, {pipeline_mode = #tpu.pipeline_mode<synchronous>, transform_indices = @transform_3, window_bounds = array<i64: 160, 150>}, {pipeline_mode = #tpu.pipeline_mode<synchronous>, transform_indices = @transform_4, window_bounds = array<i64: 160, 1>}, {pipeline_mode = #tpu.pipeline_mode<synchronous>, transform_indices = @transform_5, window_bounds = array<i64: 170, 160>}, {pipeline_mode = #tpu.pipeline_mode<synchronous>, transform_indices = @transform_6, window_bounds = array<i64: 170, 1>}, {pipeline_mode = #tpu.pipeline_mode<synchronous>, transform_indices = @transform_7, window_bounds = array<i64: 180, 170>}, {pipeline_mode = #tpu.pipeline_mode<synchronous>, transform_indices = @transform_8, window_bounds = array<i64: 180, 1>}, {pipeline_mode = #tpu.pipeline_mode<synchronous>, transform_indices = @transform_9, window_bounds = array<i64: 18, 180>}, {pipeline_mode = #tpu.pipeline_mode<synchronous>, transform_indices = @transform_10, window_bounds = array<i64: 18, 1>}, {transform_indices = @transform_11, window_bounds = array<i64: 1, 18, 60>}]} {
    %c0 = arith.constant 0 : index
    %c0_0 = arith.constant 0 : index
    %c0_1 = arith.constant 0 : index
    %0 = vector.load %arg1[%c0, %c0_0, %c0_1] : memref<1x14x60xf32, #tpu.memory_space<vmem>>, vector<1x14x60xf32>
    %1 = vector.shape_cast %0 : vector<1x14x60xf32> to vector<14x60xf32>
    %c0_2 = arith.constant 0 : index
    %c0_3 = arith.constant 0 : index
    %2 = vector.load %arg2[%c0_2, %c0_3] : memref<150x14xf32, #tpu.memory_space<vmem>>, vector<150x14xf32>
    %cst = arith.constant dense<0.000000e+00> : vector<150x60xf32>
    %3 = tpu.matmul %2, %1, %cst {dimension_numbers = #tpu.dot_dimension_numbers<[1], [0], [0], [1], [0, 0, 1, 1], [], []>} : vector<150x14xf32>, vector<14x60xf32>, vector<150x60xf32> -> vector<150x60xf32>
    %c0_4 = arith.constant 0 : index
    %c0_5 = arith.constant 0 : index
    %4 = vector.load %arg3[%c0_4, %c0_5] : memref<150x1xf32, #tpu.memory_space<vmem>>, vector<150x1xf32>
    %5 = vector.broadcast %4 : vector<150x1xf32> to vector<150x60xf32>
    %6 = arith.addf %3, %5 : vector<150x60xf32>
    %7 = math.tanh %6 : vector<150x60xf32>
    %c0_6 = arith.constant 0 : index
    %c0_7 = arith.constant 0 : index
    %8 = vector.load %arg4[%c0_6, %c0_7] : memref<160x150xf32, #tpu.memory_space<vmem>>, vector<160x150xf32>
    %cst_8 = arith.constant dense<0.000000e+00> : vector<160x60xf32>
    %9 = tpu.matmul %8, %7, %cst_8 {dimension_numbers = #tpu.dot_dimension_numbers<[1], [0], [0], [1], [0, 0, 1, 1], [], []>} : vector<160x150xf32>, vector<150x60xf32>, vector<160x60xf32> -> vector<160x60xf32>
    %c0_9 = arith.constant 0 : index
    %c0_10 = arith.constant 0 : index
    %10 = vector.load %arg5[%c0_9, %c0_10] : memref<160x1xf32, #tpu.memory_space<vmem>>, vector<160x1xf32>
    %11 = vector.broadcast %10 : vector<160x1xf32> to vector<160x60xf32>
    %12 = arith.addf %9, %11 : vector<160x60xf32>
    %13 = math.tanh %12 : vector<160x60xf32>
    %c0_11 = arith.constant 0 : index
    %c0_12 = arith.constant 0 : index
    %14 = vector.load %arg6[%c0_11, %c0_12] : memref<170x160xf32, #tpu.memory_space<vmem>>, vector<170x160xf32>
    %cst_13 = arith.constant dense<0.000000e+00> : vector<170x60xf32>
    %15 = tpu.matmul %14, %13, %cst_13 {dimension_numbers = #tpu.dot_dimension_numbers<[1], [0], [0], [1], [0, 0, 1, 1], [], []>} : vector<170x160xf32>, vector<160x60xf32>, vector<170x60xf32> -> vector<170x60xf32>
    %c0_14 = arith.constant 0 : index
    %c0_15 = arith.constant 0 : index
    %16 = vector.load %arg7[%c0_14, %c0_15] : memref<170x1xf32, #tpu.memory_space<vmem>>, vector<170x1xf32>
    %17 = vector.broadcast %16 : vector<170x1xf32> to vector<170x60xf32>
    %18 = arith.addf %15, %17 : vector<170x60xf32>
    %19 = math.tanh %18 : vector<170x60xf32>
    %c0_16 = arith.constant 0 : index
    %c0_17 = arith.constant 0 : index
    %20 = vector.load %arg8[%c0_16, %c0_17] : memref<180x170xf32, #tpu.memory_space<vmem>>, vector<180x170xf32>
    %cst_18 = arith.constant dense<0.000000e+00> : vector<180x60xf32>
    %21 = tpu.matmul %20, %19, %cst_18 {dimension_numbers = #tpu.dot_dimension_numbers<[1], [0], [0], [1], [0, 0, 1, 1], [], []>} : vector<180x170xf32>, vector<170x60xf32>, vector<180x60xf32> -> vector<180x60xf32>
    %c0_19 = arith.constant 0 : index
    %c0_20 = arith.constant 0 : index
    %22 = vector.load %arg9[%c0_19, %c0_20] : memref<180x1xf32, #tpu.memory_space<vmem>>, vector<180x1xf32>
    %23 = vector.broadcast %22 : vector<180x1xf32> to vector<180x60xf32>
    %24 = arith.addf %21, %23 : vector<180x60xf32>
    %25 = math.tanh %24 : vector<180x60xf32>
    %c0_21 = arith.constant 0 : index
    %c0_22 = arith.constant 0 : index
    %26 = vector.load %arg10[%c0_21, %c0_22] : memref<18x180xf32, #tpu.memory_space<vmem>>, vector<18x180xf32>
    %cst_23 = arith.constant dense<0.000000e+00> : vector<18x60xf32>
    %27 = tpu.matmul %26, %25, %cst_23 {dimension_numbers = #tpu.dot_dimension_numbers<[1], [0], [0], [1], [0, 0, 1, 1], [], []>} : vector<18x180xf32>, vector<180x60xf32>, vector<18x60xf32> -> vector<18x60xf32>
    %c0_24 = arith.constant 0 : index
    %c0_25 = arith.constant 0 : index
    %28 = vector.load %arg11[%c0_24, %c0_25] : memref<18x1xf32, #tpu.memory_space<vmem>>, vector<18x1xf32>
    %29 = vector.broadcast %28 : vector<18x1xf32> to vector<18x60xf32>
    %30 = arith.addf %27, %29 : vector<18x60xf32>
    %31 = math.tanh %30 : vector<18x60xf32>
    %c0_26 = arith.constant 0 : index
    %c0_27 = arith.constant 0 : index
    %c0_28 = arith.constant 0 : index
    %32 = vector.load %arg12[%c0_26, %c0_27, %c0_28] : memref<1x18x60xf32, #tpu.memory_space<vmem>>, vector<1x18x60xf32>
    %33 = vector.shape_cast %32 : vector<1x18x60xf32> to vector<18x60xf32>
    %34 = vector.shape_cast %31 : vector<18x60xf32> to vector<1x18x60xf32>
    tpu.vector_store %arg12[%c0_26, %c0_27, %c0_28], %34 {strides = array<i32>} : memref<1x18x60xf32, #tpu.memory_space<vmem>>, vector<1x18x60xf32>,
    return
  }
  func.func @transform_0(%arg0: i32) -> (i32, i32, i32) {
    %c0_i32 = arith.constant 0 : i32
    %c0_i32_0 = arith.constant 0 : i32
    %c0_i32_1 = arith.constant 0 : i32
    return %arg0, %c0_i32, %c0_i32_0 : i32, i32, i32
  }
  func.func @transform_1(%arg0: i32) -> (i32, i32) {
    %c0_i32 = arith.constant 0 : i32
    %c0_i32_0 = arith.constant 0 : i32
    %c0_i32_1 = arith.constant 0 : i32
    return %c0_i32, %c0_i32_0 : i32, i32
  }
  func.func @transform_2(%arg0: i32) -> (i32, i32) {
    %c0_i32 = arith.constant 0 : i32
    %c0_i32_0 = arith.constant 0 : i32
    %c0_i32_1 = arith.constant 0 : i32
    return %c0_i32, %c0_i32_0 : i32, i32
  }
  func.func @transform_3(%arg0: i32) -> (i32, i32) {
    %c0_i32 = arith.constant 0 : i32
    %c0_i32_0 = arith.constant 0 : i32
    %c0_i32_1 = arith.constant 0 : i32
    return %c0_i32, %c0_i32_0 : i32, i32
  }
  func.func @transform_4(%arg0: i32) -> (i32, i32) {
    %c0_i32 = arith.constant 0 : i32
    %c0_i32_0 = arith.constant 0 : i32
    %c0_i32_1 = arith.constant 0 : i32
    return %c0_i32, %c0_i32_0 : i32, i32
  }
  func.func @transform_5(%arg0: i32) -> (i32, i32) {
    %c0_i32 = arith.constant 0 : i32
    %c0_i32_0 = arith.constant 0 : i32
    %c0_i32_1 = arith.constant 0 : i32
    return %c0_i32, %c0_i32_0 : i32, i32
  }
  func.func @transform_6(%arg0: i32) -> (i32, i32) {
    %c0_i32 = arith.constant 0 : i32
    %c0_i32_0 = arith.constant 0 : i32
    %c0_i32_1 = arith.constant 0 : i32
    return %c0_i32, %c0_i32_0 : i32, i32
  }
  func.func @transform_7(%arg0: i32) -> (i32, i32) {
    %c0_i32 = arith.constant 0 : i32
    %c0_i32_0 = arith.constant 0 : i32
    %c0_i32_1 = arith.constant 0 : i32
    return %c0_i32, %c0_i32_0 : i32, i32
  }
  func.func @transform_8(%arg0: i32) -> (i32, i32) {
    %c0_i32 = arith.constant 0 : i32
    %c0_i32_0 = arith.constant 0 : i32
    %c0_i32_1 = arith.constant 0 : i32
    return %c0_i32, %c0_i32_0 : i32, i32
  }
  func.func @transform_9(%arg0: i32) -> (i32, i32) {
    %c0_i32 = arith.constant 0 : i32
    %c0_i32_0 = arith.constant 0 : i32
    %c0_i32_1 = arith.constant 0 : i32
    return %c0_i32, %c0_i32_0 : i32, i32
  }
  func.func @transform_10(%arg0: i32) -> (i32, i32) {
    %c0_i32 = arith.constant 0 : i32
    %c0_i32_0 = arith.constant 0 : i32
    %c0_i32_1 = arith.constant 0 : i32
    return %c0_i32, %c0_i32_0 : i32, i32
  }
  func.func @transform_11(%arg0: i32) -> (i32, i32, i32) {
    %c0_i32 = arith.constant 0 : i32
    %c0_i32_0 = arith.constant 0 : i32
    %c0_i32_1 = arith.constant 0 : i32
    return %arg0, %c0_i32, %c0_i32_0 : i32, i32, i32
  }
}

module attributes {stable_mosaic.version = 11 : i64} {
  func.func @_dense_kernel(%arg0: i32, %arg1: memref<2x540xf32, #tpu.memory_space<vmem>>, %arg2: memref<540x128xf32, #tpu.memory_space<vmem>>, %arg3: memref<1x128xf32, #tpu.memory_space<vmem>>, %arg4: memref<1x128xf32, #tpu.memory_space<vmem>>, %arg5: memref<1x1xf32, #tpu.memory_space<vmem>>, %arg6: memref<2x128xf32, #tpu.memory_space<vmem>>) attributes {dimension_semantics = [#tpu.dimension_semantics<parallel>], iteration_bounds = array<i64: 1>, scalar_prefetch = 0 : i64, scratch_operands = 0 : i64, tpu.core_type = #tpu.core_type<tc>, window_params = [{transform_indices = @transform_0, window_bounds = array<i64: 2, 540>}, {pipeline_mode = #tpu.pipeline_mode<synchronous>, transform_indices = @transform_1, window_bounds = array<i64: 540, 128>}, {pipeline_mode = #tpu.pipeline_mode<synchronous>, transform_indices = @transform_2, window_bounds = array<i64: 1, 128>}, {pipeline_mode = #tpu.pipeline_mode<synchronous>, transform_indices = @transform_3, window_bounds = array<i64: 1, 128>}, {pipeline_mode = #tpu.pipeline_mode<synchronous>, transform_indices = @transform_4, window_bounds = array<i64: 1, 1>}, {transform_indices = @transform_5, window_bounds = array<i64: 2, 128>}]} {
    %c0 = arith.constant 0 : index
    %c0_0 = arith.constant 0 : index
    %0 = vector.load %arg1[%c0, %c0_0] : memref<2x540xf32, #tpu.memory_space<vmem>>, vector<2x540xf32>
    %c0_1 = arith.constant 0 : index
    %c0_2 = arith.constant 0 : index
    %1 = vector.load %arg2[%c0_1, %c0_2] : memref<540x128xf32, #tpu.memory_space<vmem>>, vector<540x128xf32>
    %cst = arith.constant dense<0.000000e+00> : vector<2x128xf32>
    %2 = tpu.matmul %0, %1, %cst {dimension_numbers = #tpu.dot_dimension_numbers<[1], [0], [0], [1], [0, 0, 1, 1], [], []>} : vector<2x540xf32>, vector<540x128xf32>, vector<2x128xf32> -> vector<2x128xf32>
    %c0_3 = arith.constant 0 : index
    %c0_4 = arith.constant 0 : index
    %3 = vector.load %arg3[%c0_3, %c0_4] : memref<1x128xf32, #tpu.memory_space<vmem>>, vector<1x128xf32>
    %4 = vector.broadcast %3 : vector<1x128xf32> to vector<2x128xf32>
    %5 = arith.addf %2, %4 : vector<2x128xf32>
    %6 = math.tanh %5 : vector<2x128xf32>
    %c0_5 = arith.constant 0 : index
    %c0_6 = arith.constant 0 : index
    %7 = vector.load %arg4[%c0_5, %c0_6] : memref<1x128xf32, #tpu.memory_space<vmem>>, vector<1x128xf32>
    %8 = vector.broadcast %7 : vector<1x128xf32> to vector<2x128xf32>
    %9 = arith.mulf %6, %8 : vector<2x128xf32>
    %cst_7 = arith.constant dense<0.000000e+00> : vector<2xf32>
    %10 = vector.multi_reduction <add>, %9, %cst_7 [1] : vector<2x128xf32> to vector<2xf32>
    %11 = vector.shape_cast %10 : vector<2xf32> to vector<2x1xf32>
    %c0_8 = arith.constant 0 : index
    %c0_9 = arith.constant 0 : index
    %12 = vector.load %arg5[%c0_8, %c0_9] : memref<1x1xf32, #tpu.memory_space<vmem>>, vector<1x1xf32>
    %13 = vector.broadcast %12 : vector<1x1xf32> to vector<2x1xf32>
    %14 = arith.addf %11, %13 : vector<2x1xf32>
    %15 = vector.shape_cast %14 : vector<2x1xf32> to vector<2x1xf32>
    %16 = vector.broadcast %15 : vector<2x1xf32> to vector<2x128xf32>
    %c0_10 = arith.constant 0 : index
    %c0_11 = arith.constant 0 : index
    %17 = vector.load %arg6[%c0_10, %c0_11] : memref<2x128xf32, #tpu.memory_space<vmem>>, vector<2x128xf32>
    tpu.vector_store %arg6[%c0_10, %c0_11], %16 {strides = array<i32>} : memref<2x128xf32, #tpu.memory_space<vmem>>, vector<2x128xf32>,
    return
  }
  func.func @transform_0(%arg0: i32) -> (i32, i32) {
    %c0_i32 = arith.constant 0 : i32
    %c0_i32_0 = arith.constant 0 : i32
    return %arg0, %c0_i32 : i32, i32
  }
  func.func @transform_1(%arg0: i32) -> (i32, i32) {
    %c0_i32 = arith.constant 0 : i32
    %c0_i32_0 = arith.constant 0 : i32
    %c0_i32_1 = arith.constant 0 : i32
    return %c0_i32, %c0_i32_0 : i32, i32
  }
  func.func @transform_2(%arg0: i32) -> (i32, i32) {
    %c0_i32 = arith.constant 0 : i32
    %c0_i32_0 = arith.constant 0 : i32
    %c0_i32_1 = arith.constant 0 : i32
    return %c0_i32, %c0_i32_0 : i32, i32
  }
  func.func @transform_3(%arg0: i32) -> (i32, i32) {
    %c0_i32 = arith.constant 0 : i32
    %c0_i32_0 = arith.constant 0 : i32
    %c0_i32_1 = arith.constant 0 : i32
    return %c0_i32, %c0_i32_0 : i32, i32
  }
  func.func @transform_4(%arg0: i32) -> (i32, i32) {
    %c0_i32 = arith.constant 0 : i32
    %c0_i32_0 = arith.constant 0 : i32
    %c0_i32_1 = arith.constant 0 : i32
    return %c0_i32, %c0_i32_0 : i32, i32
  }
  func.func @transform_5(%arg0: i32) -> (i32, i32) {
    %c0_i32 = arith.constant 0 : i32
    %c0_i32_0 = arith.constant 0 : i32
    return %arg0, %c0_i32 : i32, i32
  }
}

</mosaic_0001>

<llo_original>
// kernel: cnn_rul_forward.3
$region0: #{cnn_rul_forward.3}
  #allocation0 [shape = 'u32[]', space=smem, size = 0x4, offset = 0x4, fixed_abs, tag = 'smem constant byte address 0x4 - core index']
  #allocation1 [shape = 'u32[72,128]{1,0:T(1,128)}', space=vmem, size = 0x9000, scoped, tag = 'internal scratch']
  #allocation2 [shape = 'f32[1,1]{1,0:T(1,128)S(1)}', space=vmem, size = 0x200, scoped, tag = 'scoped memory for cnn_rul_forward.3']
  %s0 = inlined_call_operand.vmem [shape: f32[2,540], index: 0, kind: input, shape index: {}]
  %s1 = inlined_call_operand.vmem [shape: f32[540,128], index: 1, kind: input, shape index: {}]
  %s2 = inlined_call_operand.vmem [shape: f32[1,128], index: 2, kind: input, shape index: {}]
  %s3 = inlined_call_operand.vmem [shape: f32[1,128], index: 3, kind: input, shape index: {}]
  %s4 = inlined_call_operand.<no memory space> [shape: f32[1,1], index: 4, kind: input, shape index: {}]
  %s5 = inlined_call_operand.vmem [shape: f32[2,128], index: 5, kind: output, shape index: {}]
  %s6 = sld [smem:[#allocation0]]
  $region30: #{cnn_rul_forward.3} parent=0
    _
  %s8 = ssub.s32 1, %s6
  %s9 = scalar_select 0, %s8, %s6
  %v10 = vstv %s4
  %11 = vst [vmem:[#allocation2] sm:$0x1] %v10
  // Predicated region
  $region2: #{cnn_rul_forward.3} parent=0 // pred_check
    _
  $region3: #{cnn_rul_forward.3} parent=0 // pred_check_branch
    %13 = sbr.rel (0) target = $region5
  $region4: #{cnn_rul_forward.3} parent=0 // pred_region
    _
  $region5: #{cnn_rul_forward.3} parent=0 // pred_fallthru
    _
  // Predicated region
  $region6: #{cnn_rul_forward.3} parent=0 // pred_check
    _
  $region7: #{cnn_rul_forward.3} parent=0 // pred_check_branch
    %15 = sbr.rel (0) target = $region9
  $region8: #{cnn_rul_forward.3} parent=0 // pred_region
    _
  $region9: #{cnn_rul_forward.3} parent=0 // pred_fallthru
    _
  // Predicated region
  $region10: #{cnn_rul_forward.3} parent=0 // pred_check
    _
  $region11: #{cnn_rul_forward.3} parent=0 // pred_check_branch
    %17 = sbr.rel (0) target = $region13
  $region12: #{cnn_rul_forward.3} parent=0 // pred_region
    _
  $region13: #{cnn_rul_forward.3} parent=0 // pred_fallthru
    _
  // Predicated region
  $region14: #{cnn_rul_forward.3} parent=0 // pred_check
    _
  $region15: #{cnn_rul_forward.3} parent=0 // pred_check_branch
    %19 = sbr.rel (0) target = $region17
  $region16: #{cnn_rul_forward.3} parent=0 // pred_region
    _
  $region17: #{cnn_rul_forward.3} parent=0 // pred_fallthru
    _
  // Predicated region
  $region18: #{cnn_rul_forward.3} parent=0 // pred_check
    _
  $region19: #{cnn_rul_forward.3} parent=0 // pred_check_branch
    %21 = sbr.rel (0) target = $region21
  $region20: #{cnn_rul_forward.3} parent=0 // pred_region
    _
  $region21: #{cnn_rul_forward.3} parent=0 // pred_fallthru
    _
  %v22 = vld [vmem:[%s0] sm:$0xff]
  %v23 = vld [vmem:[%s0 + $0x8] sm:$0x3]
  %v24 = vld [vmem:[%s1] sm:$0xff]
  %v25 = vld [vmem:[%s1 + $0x8] sm:$0xff]
  %v26 = vld [vmem:[%s1 + $0x10] sm:$0xff]
  %v27 = vld [vmem:[%s1 + $0x18] sm:$0xff]
  %v28 = vld [vmem:[%s1 + $0x20] sm:$0xff]
  %v29 = vld [vmem:[%s1 + $0x28] sm:$0xff]
  %v30 = vld [vmem:[%s1 + $0x30] sm:$0xff]
  %v31 = vld [vmem:[%s1 + $0x38] sm:$0xff]
  %v32 = vld [vmem:[%s1 + $0x40] sm:$0xff]
  %v33 = vld [vmem:[%s1 + $0x48] sm:$0xff]
  %v34 = vld [vmem:[%s1 + $0x50] sm:$0xff]
  %v35 = vld [vmem:[%s1 + $0x58] sm:$0xff]
  %v36 = vld [vmem:[%s1 + $0x60] sm:$0xff]
  %v37 = vld [vmem:[%s1 + $0x68] sm:$0xff]
  %v38 = vld [vmem:[%s1 + $0x70] sm:$0xff]
  %v39 = vld [vmem:[%s1 + $0x78] sm:$0xff]
  %v40 = vld [vmem:[%s1 + $0x80] sm:$0xff]
  %v41 = vld [vmem:[%s1 + $0x88] sm:$0xff]
  %v42 = vld [vmem:[%s1 + $0x90] sm:$0xff]
  %v43 = vld [vmem:[%s1 + $0x98] sm:$0xff]
  %v44 = vld [vmem:[%s1 + $0xa0] sm:$0xff]
  %v45 = vld [vmem:[%s1 + $0xa8] sm:$0xff]
  %v46 = vld [vmem:[%s1 + $0xb0] sm:$0xff]
  %v47 = vld [vmem:[%s1 + $0xb8] sm:$0xff]
  %v48 = vld [vmem:[%s1 + $0xc0] sm:$0xff]
  %v49 = vld [vmem:[%s1 + $0xc8] sm:$0xff]
  %v50 = vld [vmem:[%s1 + $0xd0] sm:$0xff]
  %v51 = vld [vmem:[%s1 + $0xd8] sm:$0xff]
  %v52 = vld [vmem:[%s1 + $0xe0] sm:$0xff]
  %v53 = vld [vmem:[%s1 + $0xe8] sm:$0xff]
  %v54 = vld [vmem:[%s1 + $0xf0] sm:$0xff]
  %v55 = vld [vmem:[%s1 + $0xf8] sm:$0xff]
  %v56 = vld [vmem:[%s1 + $0x100] sm:$0xff]
  %v57 = vld [vmem:[%s1 + $0x108] sm:$0xff]
  %v58 = vld [vmem:[%s1 + $0x110] sm:$0xff]
  %v59 = vld [vmem:[%s1 + $0x118] sm:$0xff]
  %v60 = vld [vmem:[%s1 + $0x120] sm:$0xff]
  %v61 = vld [vmem:[%s1 + $0x128] sm:$0xff]
  %v62 = vld [vmem:[%s1 + $0x130] sm:$0xff]
  %v63 = vld [vmem:[%s1 + $0x138] sm:$0xff]
  %v64 = vld [vmem:[%s1 + $0x140] sm:$0xff]
  %v65 = vld [vmem:[%s1 + $0x148] sm:$0xff]
  %v66 = vld [vmem:[%s1 + $0x150] sm:$0xff]
  %v67 = vld [vmem:[%s1 + $0x158] sm:$0xff]
  %v68 = vld [vmem:[%s1 + $0x160] sm:$0xff]
  %v69 = vld [vmem:[%s1 + $0x168] sm:$0xff]
  %v70 = vld [vmem:[%s1 + $0x170] sm:$0xff]
  %v71 = vld [vmem:[%s1 + $0x178] sm:$0xff]
  %v72 = vld [vmem:[%s1 + $0x180] sm:$0xff]
  %v73 = vld [vmem:[%s1 + $0x188] sm:$0xff]
  %v74 = vld [vmem:[%s1 + $0x190] sm:$0xff]
  %v75 = vld [vmem:[%s1 + $0x198] sm:$0xff]
  %v76 = vld [vmem:[%s1 + $0x1a0] sm:$0xff]
  %v77 = vld [vmem:[%s1 + $0x1a8] sm:$0xff]
  %v78 = vld [vmem:[%s1 + $0x1b0] sm:$0xff]
  %v79 = vld [vmem:[%s1 + $0x1b8] sm:$0xff]
  %v80 = vld [vmem:[%s1 + $0x1c0] sm:$0xff]
  %v81 = vld [vmem:[%s1 + $0x1c8] sm:$0xff]
  %v82 = vld [vmem:[%s1 + $0x1d0] sm:$0xff]
  %v83 = vld [vmem:[%s1 + $0x1d8] sm:$0xff]
  %v84 = vld [vmem:[%s1 + $0x1e0] sm:$0xff]
  %v85 = vld [vmem:[%s1 + $0x1e8] sm:$0xff]
  %v86 = vld [vmem:[%s1 + $0x1f0] sm:$0xff]
  %v87 = vld [vmem:[%s1 + $0x1f8] sm:$0xff]
  %v88 = vld [vmem:[%s1 + $0x200] sm:$0xff]
  %v89 = vld [vmem:[%s1 + $0x208] sm:$0xff]
  %v90 = vld [vmem:[%s1 + $0x210] sm:$0xff]
  %v91 = vld [vmem:[%s1 + $0x218] sm:$0xf]
  %v92 = vld [vmem:[%s2] sm:$0x1]
  %v94 = vperm.slane %v92, 0
  %98 = vst [vmem:[#allocation1] ss:$4 sm:$0xff] %v22
  %s99 = scalar_lea.vmem [#allocation1], 32
  %100 = vst [vmem:[%s99] ss:$4 sm:$0xff] %v23
  %v101 = vld.sshfl [vmem:[#allocation1] sm:$0xff pattern:$0x73625140]
  %v102 = vld.sshfl [vmem:[#allocation1 + $0x8] sm:$0xff pattern:$0x73625140]
  %v103 = vld.sshfl [vmem:[#allocation1 + $0x10] sm:$0xff pattern:$0x73625140]
  %v104 = vld.sshfl [vmem:[#allocation1 + $0x18] sm:$0xff pattern:$0x73625140]
  %v105 = vld.sshfl [vmem:[#allocation1 + $0x20] sm:$0xff pattern:$0x73625140]
  %vm110 = vcmask 228352
  %v111 = vsel %vm110, %v105, 0
  %vm113 = vcmask 1043456
  %v115 = vsel %vm113, %v91, 0
  %117 = vmatpush.msra.mxu0 %v39
  %118 = vmatpush.msra.mxu0 %v38
  %119 = vmatpush.msra.mxu0 %v37
  %120 = vmatpush.msra.mxu0 %v36
  %121 = vmatpush.msra.mxu0 %v35
  %122 = vmatpush.msra.mxu0 %v34
  %123 = vmatpush.msra.mxu0 %v33
  %124 = vmatpush.msra.mxu0 %v32
  %125 = vmatpush.msra.mxu0 %v31
  %126 = vmatpush.msra.mxu0 %v30
  %127 = vmatpush.msra.mxu0 %v29
  %128 = vmatpush.msra.mxu0 %v28
  %129 = vmatpush.msra.mxu0 %v27
  %130 = vmatpush.msra.mxu0 %v26
  %131 = vmatpush.msra.mxu0 %v25
  %132 = vmatpush.msra.mxu0 %v24
  %133 = vmatmul.f32.gmra.mxu0 %v101
  %v134 = vpop.f32.mrf.mxu0
  %v135 = vadd.f32 %v94, %v134
  %136 = vdwg.mxu0
  %137 = vmatpush.msra.mxu0 %v55
  %138 = vmatpush.msra.mxu0 %v54
  %139 = vmatpush.msra.mxu0 %v53
  %140 = vmatpush.msra.mxu0 %v52
  %141 = vmatpush.msra.mxu0 %v51
  %142 = vmatpush.msra.mxu0 %v50
  %143 = vmatpush.msra.mxu0 %v49
  %144 = vmatpush.msra.mxu0 %v48
  %145 = vmatpush.msra.mxu0 %v47
  %146 = vmatpush.msra.mxu0 %v46
  %147 = vmatpush.msra.mxu0 %v45
  %148 = vmatpush.msra.mxu0 %v44
  %149 = vmatpush.msra.mxu0 %v43
  %150 = vmatpush.msra.mxu0 %v42
  %151 = vmatpush.msra.mxu0 %v41
  %152 = vmatpush.msra.mxu0 %v40
  %153 = vmatmul.f32.gmra.mxu0 %v102
  %v154 = vpop.f32.mrf.mxu0
  %v155 = vadd.f32 %v135, %v154
  %156 = vdwg.mxu0
  %157 = vmatpush.msra.mxu0 %v71
  %158 = vmatpush.msra.mxu0 %v70
  %159 = vmatpush.msra.mxu0 %v69
  %160 = vmatpush.msra.mxu0 %v68
  %161 = vmatpush.msra.mxu0 %v67
  %162 = vmatpush.msra.mxu0 %v66
  %163 = vmatpush.msra.mxu0 %v65
  %164 = vmatpush.msra.mxu0 %v64
  %165 = vmatpush.msra.mxu0 %v63
  %166 = vmatpush.msra.mxu0 %v62
  %167 = vmatpush.msra.mxu0 %v61
  %168 = vmatpush.msra.mxu0 %v60
  %169 = vmatpush.msra.mxu0 %v59
  %170 = vmatpush.msra.mxu0 %v58
  %171 = vmatpush.msra.mxu0 %v57
  %172 = vmatpush.msra.mxu0 %v56
  %173 = vmatmul.f32.gmra.mxu0 %v103
  %v174 = vpop.f32.mrf.mxu0
  %v175 = vadd.f32 %v155, %v174
  %176 = vdwg.mxu0
  %177 = vmatpush.msra.mxu0 %v87
  %178 = vmatpush.msra.mxu0 %v86
  %179 = vmatpush.msra.mxu0 %v85
  %180 = vmatpush.msra.mxu0 %v84
  %181 = vmatpush.msra.mxu0 %v83
  %182 = vmatpush.msra.mxu0 %v82
  %183 = vmatpush.msra.mxu0 %v81
  %184 = vmatpush.msra.mxu0 %v80
  %185 = vmatpush.msra.mxu0 %v79
  %186 = vmatpush.msra.mxu0 %v78
  %187 = vmatpush.msra.mxu0 %v77
  %188 = vmatpush.msra.mxu0 %v76
  %189 = vmatpush.msra.mxu0 %v75
  %190 = vmatpush.msra.mxu0 %v74
  %191 = vmatpush.msra.mxu0 %v73
  %192 = vmatpush.msra.mxu0 %v72
  %193 = vmatmul.f32.gmra.mxu0 %v104
  %v194 = vpop.f32.mrf.mxu0
  %v195 = vadd.f32 %v175, %v194
  %196 = vdwg.mxu0
  %197 = vmatpush.msra.mxu0 0.0
  %198 = vmatpush.msra.mxu0 0.0
  %199 = vmatpush.msra.mxu0 0.0
  %200 = vmatpush.msra.mxu0 0.0
  %201 = vmatpush.msra.mxu0 0.0
  %202 = vmatpush.msra.mxu0 0.0
  %203 = vmatpush.msra.mxu0 0.0
  %204 = vmatpush.msra.mxu0 0.0
  %205 = vmatpush.msra.mxu0 0.0
  %206 = vmatpush.msra.mxu0 0.0
  %207 = vmatpush.msra.mxu0 0.0
  %208 = vmatpush.msra.mxu0 0.0
  %209 = vmatpush.msra.mxu0 %v115
  %210 = vmatpush.msra.mxu0 %v90
  %211 = vmatpush.msra.mxu0 %v89
  %212 = vmatpush.msra.mxu0 %v88
  %213 = vmatmul.f32.gmra.mxu0 %v111
  %v214 = vpop.f32.mrf.mxu0
  %v215 = vadd.f32 %v195, %v214
  %216 = vdwg.mxu0
  %v217 = vtanh.pop %v215
  %v218 = vld [vmem:[%s3] sm:$0x1]
  %v220 = vperm.slane %v218, 0
  %v222 = vmul.f32 %v217, %v220
  %vm223 = vcmask 1041408
  %v224 = vsel %vm223, %v222, 0.0
  %225 = vadd.xlane.f32.xlu0 %v224
  %v226 = vpop.xlane.xlu0 %225
  %v227 = vld [vmem:[#allocation2] sm:$0x1]
  %v229 = vperm.slane %v227, 0
  %v231 = vadd.f32 %v226, %v229
  %233 = vset.pattern.permute.xlu0 0
  %234 = vperm.xlu0 %233, %v231
  %v235 = vpop.permute.xlu0 %234
  %237 = vst [vmem:[%s5] sm:$0x3] %v235
  // Predicated region
  $region22: #{cnn_rul_forward.3} parent=0 // pred_check
    _
  $region23: #{cnn_rul_forward.3} parent=0 // pred_check_branch
    %239 = sbr.rel (0) target = $region25
  $region24: #{cnn_rul_forward.3} parent=0 // pred_region
    _
  $region25: #{cnn_rul_forward.3} parent=0 // pred_fallthru
    _
  // Predicated region
  $region26: #{cnn_rul_forward.3} parent=0 // pred_check
    _
  $region27: #{cnn_rul_forward.3} parent=0 // pred_check_branch
    %241 = sbr.rel (0) target = $region29
  $region28: #{cnn_rul_forward.3} parent=0 // pred_region
    _
  $region29: #{cnn_rul_forward.3} parent=0 // pred_fallthru
    _

// kernel: cnn_rul_forward.2
$region0: #{cnn_rul_forward.2}
  #allocation0 [shape = 'u32[]', space=smem, size = 0x4, offset = 0x4, fixed_abs, tag = 'smem constant byte address 0x4 - core index']
  #allocation1 [shape = 'u32[72,128]{1,0:T(1,128)}', space=vmem, size = 0x9000, scoped, tag = 'internal scratch']
  %s0 = inlined_call_operand.vmem [shape: f32[1,14,60], index: 0, kind: input, shape index: {}]
  %s1 = inlined_call_operand.vmem [shape: f32[150,14], index: 1, kind: input, shape index: {}]
  %s2 = inlined_call_operand.vmem [shape: f32[150,1], index: 2, kind: input, shape index: {}]
  %s3 = inlined_call_operand.vmem [shape: f32[160,150], index: 3, kind: input, shape index: {}]
  %s4 = inlined_call_operand.vmem [shape: f32[160,1], index: 4, kind: input, shape index: {}]
  %s5 = inlined_call_operand.vmem [shape: f32[170,160], index: 5, kind: input, shape index: {}]
  %s6 = inlined_call_operand.vmem [shape: f32[170,1], index: 6, kind: input, shape index: {}]
  %s7 = inlined_call_operand.vmem [shape: f32[180,170], index: 7, kind: input, shape index: {}]
  %s8 = inlined_call_operand.vmem [shape: f32[180,1], index: 8, kind: input, shape index: {}]
  %s9 = inlined_call_operand.vmem [shape: f32[18,180], index: 9, kind: input, shape index: {}]
  %s10 = inlined_call_operand.vmem [shape: f32[18,1], index: 10, kind: input, shape index: {}]
  %s11 = inlined_call_operand.vmem [shape: f32[1,18,60], index: 11, kind: output, shape index: {}]
  %s12 = sld [smem:[#allocation0]]
  $region54: #{cnn_rul_forward.2} parent=0
    _
  %s14 = ssub.s32 1, %s12
  %s15 = scalar_select 0, %s14, %s12
  // Predicated region
  $region2: #{cnn_rul_forward.2} parent=0 // pred_check
    _
  $region3: #{cnn_rul_forward.2} parent=0 // pred_check_branch
    %17 = sbr.rel (0) target = $region5
  $region4: #{cnn_rul_forward.2} parent=0 // pred_region
    _
  $region5: #{cnn_rul_forward.2} parent=0 // pred_fallthru
    _
  // Predicated region
  $region6: #{cnn_rul_forward.2} parent=0 // pred_check
    _
  $region7: #{cnn_rul_forward.2} parent=0 // pred_check_branch
    %19 = sbr.rel (0) target = $region9
  $region8: #{cnn_rul_forward.2} parent=0 // pred_region
    _
  $region9: #{cnn_rul_forward.2} parent=0 // pred_fallthru
    _
  // Predicated region
  $region10: #{cnn_rul_forward.2} parent=0 // pred_check
    _
  $region11: #{cnn_rul_forward.2} parent=0 // pred_check_branch
    %21 = sbr.rel (0) target = $region13
  $region12: #{cnn_rul_forward.2} parent=0 // pred_region
    _
  $region13: #{cnn_rul_forward.2} parent=0 // pred_fallthru
    _
  // Predicated region
  $region14: #{cnn_rul_forward.2} parent=0 // pred_check
    _
  $region15: #{cnn_rul_forward.2} parent=0 // pred_check_branch
    %23 = sbr.rel (0) target = $region17
  $region16: #{cnn_rul_forward.2} parent=0 // pred_region
    _
  $region17: #{cnn_rul_forward.2} parent=0 // pred_fallthru
    _
  // Predicated region
  $region18: #{cnn_rul_forward.2} parent=0 // pred_check
    _
  $region19: #{cnn_rul_forward.2} parent=0 // pred_check_branch
    %25 = sbr.rel (0) target = $region21
  $region20: #{cnn_rul_forward.2} parent=0 // pred_region
    _
  $region21: #{cnn_rul_forward.2} parent=0 // pred_fallthru
    _
  // Predicated region
  $region22: #{cnn_rul_forward.2} parent=0 // pred_check
    _
  $region23: #{cnn_rul_forward.2} parent=0 // pred_check_branch
    %27 = sbr.rel (0) target = $region25
  $region24: #{cnn_rul_forward.2} parent=0 // pred_region
    _
  $region25: #{cnn_rul_forward.2} parent=0 // pred_fallthru
    _
  // Predicated region
  $region26: #{cnn_rul_forward.2} parent=0 // pred_check
    _
  $region27: #{cnn_rul_forward.2} parent=0 // pred_check_branch
    %29 = sbr.rel (0) target = $region29
  $region28: #{cnn_rul_forward.2} parent=0 // pred_region
    _
  $region29: #{cnn_rul_forward.2} parent=0 // pred_fallthru
    _
  // Predicated region
  $region30: #{cnn_rul_forward.2} parent=0 // pred_check
    _
  $region31: #{cnn_rul_forward.2} parent=0 // pred_check_branch
    %31 = sbr.rel (0) target = $region33
  $region32: #{cnn_rul_forward.2} parent=0 // pred_region
    _
  $region33: #{cnn_rul_forward.2} parent=0 // pred_fallthru
    _
  // Predicated region
  $region34: #{cnn_rul_forward.2} parent=0 // pred_check
    _
  $region35: #{cnn_rul_forward.2} parent=0 // pred_check_branch
    %33 = sbr.rel (0) target = $region37
  $region36: #{cnn_rul_forward.2} parent=0 // pred_region
    _
  $region37: #{cnn_rul_forward.2} parent=0 // pred_fallthru
    _
  // Predicated region
  $region38: #{cnn_rul_forward.2} parent=0 // pred_check
    _
  $region39: #{cnn_rul_forward.2} parent=0 // pred_check_branch
    %35 = sbr.rel (0) target = $region41
  $region40: #{cnn_rul_forward.2} parent=0 // pred_region
    _
  $region41: #{cnn_rul_forward.2} parent=0 // pred_fallthru
    _
  // Predicated region
  $region42: #{cnn_rul_forward.2} parent=0 // pred_check
    _
  $region43: #{cnn_rul_forward.2} parent=0 // pred_check_branch
    %37 = sbr.rel (0) target = $region45
  $region44: #{cnn_rul_forward.2} parent=0 // pred_region
    _
  $region45: #{cnn_rul_forward.2} parent=0 // pred_fallthru
    _
  %v38 = vld [vmem:[%s0] sm:$0xff]
  %v39 = vld [vmem:[%s0 + $0x8] sm:$0x3f]
  %v40 = vld [vmem:[%s1] sm:$0xff]
  %v41 = vld [vmem:[%s1 + $0x8] sm:$0xff]
  %v42 = vld [vmem:[%s1 + $0x10] sm:$0xff]
  %v43 = vld [vmem:[%s1 + $0x18] sm:$0xff]
  %v44 = vld [vmem:[%s1 + $0x20] sm:$0xff]
  %v45 = vld [vmem:[%s1 + $0x28] sm:$0xff]
  %v46 = vld [vmem:[%s1 + $0x30] sm:$0xff]
  %v47 = vld [vmem:[%s1 + $0x38] sm:$0xff]
  %v48 = vld [vmem:[%s1 + $0x40] sm:$0xff]
  %v49 = vld [vmem:[%s1 + $0x48] sm:$0xff]
  %v50 = vld [vmem:[%s1 + $0x50] sm:$0xff]
  %v51 = vld [vmem:[%s1 + $0x58] sm:$0xff]
  %v52 = vld [vmem:[%s1 + $0x60] sm:$0xff]
  %v53 = vld [vmem:[%s1 + $0x68] sm:$0xff]
  %v54 = vld [vmem:[%s1 + $0x70] sm:$0xff]
  %v55 = vld [vmem:[%s1 + $0x78] sm:$0xff]
  %v56 = vld [vmem:[%s1 + $0x80] sm:$0xff]
  %v57 = vld [vmem:[%s1 + $0x88] sm:$0xff]
  %v58 = vld [vmem:[%s1 + $0x90] sm:$0x3f]
  %v59 = vld [vmem:[%s2] sm:$0xff]
  %v60 = vld [vmem:[%s2 + $0x8] sm:$0xff]
  %v61 = vld [vmem:[%s2 + $0x10] sm:$0xff]
  %v62 = vld [vmem:[%s2 + $0x18] sm:$0xff]
  %v63 = vld [vmem:[%s2 + $0x20] sm:$0xff]
  %v64 = vld [vmem:[%s2 + $0x28] sm:$0xff]
  %v65 = vld [vmem:[%s2 + $0x30] sm:$0xff]
  %v66 = vld [vmem:[%s2 + $0x38] sm:$0xff]
  %v67 = vld [vmem:[%s2 + $0x40] sm:$0xff]
  %v68 = vld [vmem:[%s2 + $0x48] sm:$0xff]
  %v69 = vld [vmem:[%s2 + $0x50] sm:$0xff]
  %v70 = vld [vmem:[%s2 + $0x58] sm:$0xff]
  %v71 = vld [vmem:[%s2 + $0x60] sm:$0xff]
  %v72 = vld [vmem:[%s2 + $0x68] sm:$0xff]
  %v73 = vld [vmem:[%s2 + $0x70] sm:$0xff]
  %v74 = vld [vmem:[%s2 + $0x78] sm:$0xff]
  %v75 = vld [vmem:[%s2 + $0x80] sm:$0xff]
  %v76 = vld [vmem:[%s2 + $0x88] sm:$0xff]
  %v77 = vld [vmem:[%s2 + $0x90] sm:$0x3f]
  %79 = vset.pattern.permute.xlu0 0
  %80 = vperm.xlu0 %79, %v59
  %v81 = vpop.permute.xlu0 %80
  %84 = vset.pattern.permute.xlu0 0
  %85 = vperm.xlu0 %84, %v60
  %v86 = vpop.permute.xlu0 %85
  %89 = vset.pattern.permute.xlu0 0
  %90 = vperm.xlu0 %89, %v61
  %v91 = vpop.permute.xlu0 %90
  %94 = vset.pattern.permute.xlu0 0
  %95 = vperm.xlu0 %94, %v62
  %v96 = vpop.permute.xlu0 %95
  %99 = vset.pattern.permute.xlu0 0
  %100 = vperm.xlu0 %99, %v63
  %v101 = vpop.permute.xlu0 %100
  %104 = vset.pattern.permute.xlu0 0
  %105 = vperm.xlu0 %104, %v64
  %v106 = vpop.permute.xlu0 %105
  %109 = vset.pattern.permute.xlu0 0
  %110 = vperm.xlu0 %109, %v65
  %v111 = vpop.permute.xlu0 %110
  %114 = vset.pattern.permute.xlu0 0
  %115 = vperm.xlu0 %114, %v66
  %v116 = vpop.permute.xlu0 %115
  %119 = vset.pattern.permute.xlu0 0
  %120 = vperm.xlu0 %119, %v67
  %v121 = vpop.permute.xlu0 %120
  %124 = vset.pattern.permute.xlu0 0
  %125 = vperm.xlu0 %124, %v68
  %v126 = vpop.permute.xlu0 %125
  %129 = vset.pattern.permute.xlu0 0
  %130 = vperm.xlu0 %129, %v69
  %v131 = vpop.permute.xlu0 %130
  %134 = vset.pattern.permute.xlu0 0
  %135 = vperm.xlu0 %134, %v70
  %v136 = vpop.permute.xlu0 %135
  %139 = vset.pattern.permute.xlu0 0
  %140 = vperm.xlu0 %139, %v71
  %v141 = vpop.permute.xlu0 %140
  %144 = vset.pattern.permute.xlu0 0
  %145 = vperm.xlu0 %144, %v72
  %v146 = vpop.permute.xlu0 %145
  %149 = vset.pattern.permute.xlu0 0
  %150 = vperm.xlu0 %149, %v73
  %v151 = vpop.permute.xlu0 %150
  %154 = vset.pattern.permute.xlu0 0
  %155 = vperm.xlu0 %154, %v74
  %v156 = vpop.permute.xlu0 %155
  %159 = vset.pattern.permute.xlu0 0
  %160 = vperm.xlu0 %159, %v75
  %v161 = vpop.permute.xlu0 %160
  %164 = vset.pattern.permute.xlu0 0
  %165 = vperm.xlu0 %164, %v76
  %v166 = vpop.permute.xlu0 %165
  %169 = vset.pattern.permute.xlu0 0
  %170 = vperm.xlu0 %169, %v77
  %v171 = vpop.permute.xlu0 %170
  %vm173 = vcmask 113664
  %v175 = vsel %vm173, %v40, 0
  %v178 = vsel %vm173, %v41, 0
  %v181 = vsel %vm173, %v42, 0
  %v184 = vsel %vm173, %v43, 0
  %v187 = vsel %vm173, %v44, 0
  %v190 = vsel %vm173, %v45, 0
  %v193 = vsel %vm173, %v46, 0
  %v196 = vsel %vm173, %v47, 0
  %v199 = vsel %vm173, %v48, 0
  %v202 = vsel %vm173, %v49, 0
  %v205 = vsel %vm173, %v50, 0
  %v208 = vsel %vm173, %v51, 0
  %v211 = vsel %vm173, %v52, 0
  %v214 = vsel %vm173, %v53, 0
  %v217 = vsel %vm173, %v54, 0
  %v220 = vsel %vm173, %v55, 0
  %v223 = vsel %vm173, %v56, 0
  %v226 = vsel %vm173, %v57, 0
  %v229 = vsel %vm173, %v58, 0
  %vm231 = vcmask 1045504
  %v233 = vsel %vm231, %v39, 0
  %235 = vmatpush.msra.mxu0 0.0
  %236 = vmatpush.msra.mxu0 0.0
  %237 = vmatpush.msra.mxu0 0.0
  %238 = vmatpush.msra.mxu0 0.0
  %239 = vmatpush.msra.mxu0 0.0
  %240 = vmatpush.msra.mxu0 0.0
  %241 = vmatpush.msra.mxu0 0.0
  %242 = vmatpush.msra.mxu0 0.0
  %243 = vmatpush.msra.mxu0 0.0
  %244 = vmatpush.msra.mxu0 0.0
  %245 = vmatpush.msra.mxu0 0.0
  %246 = vmatpush.msra.mxu0 0.0
  %247 = vmatpush.msra.mxu0 0.0
  %248 = vmatpush.msra.mxu0 0.0
  %249 = vmatpush.msra.mxu0 %v233
  %250 = vmatpush.msra.mxu0 %v38
  %251 = vmatmul.f32.gmra.mxu0 %v175
  %v252 = vpop.f32.mrf.mxu0
  %v253 = vadd.f32 %v81, %v252
  %254 = vmatmul.f32.gmra.mxu0 %v178
  %v255 = vpop.f32.mrf.mxu0
  %v256 = vadd.f32 %v86, %v255
  %257 = vmatmul.f32.gmra.mxu0 %v181
  %v258 = vpop.f32.mrf.mxu0
  %v259 = vadd.f32 %v91, %v258
  %260 = vmatmul.f32.gmra.mxu0 %v184
  %v261 = vpop.f32.mrf.mxu0
  %v262 = vadd.f32 %v96, %v261
  %263 = vmatmul.f32.gmra.mxu0 %v187
  %v264 = vpop.f32.mrf.mxu0
  %v265 = vadd.f32 %v101, %v264
  %266 = vmatmul.f32.gmra.mxu0 %v190
  %v267 = vpop.f32.mrf.mxu0
  %v268 = vadd.f32 %v106, %v267
  %269 = vmatmul.f32.gmra.mxu0 %v193
  %v270 = vpop.f32.mrf.mxu0
  %v271 = vadd.f32 %v111, %v270
  %272 = vmatmul.f32.gmra.mxu0 %v196
  %v273 = vpop.f32.mrf.mxu0
  %v274 = vadd.f32 %v116, %v273
  %275 = vmatmul.f32.gmra.mxu0 %v199
  %v276 = vpop.f32.mrf.mxu0
  %v277 = vadd.f32 %v121, %v276
  %278 = vmatmul.f32.gmra.mxu0 %v202
  %v279 = vpop.f32.mrf.mxu0
  %v280 = vadd.f32 %v126, %v279
  %281 = vmatmul.f32.gmra.mxu0 %v205
  %v282 = vpop.f32.mrf.mxu0
  %v283 = vadd.f32 %v131, %v282
  %284 = vmatmul.f32.gmra.mxu0 %v208
  %v285 = vpop.f32.mrf.mxu0
  %v286 = vadd.f32 %v136, %v285
  %287 = vmatmul.f32.gmra.mxu0 %v211
  %v288 = vpop.f32.mrf.mxu0
  %v289 = vadd.f32 %v141, %v288
  %290 = vmatmul.f32.gmra.mxu0 %v214
  %v291 = vpop.f32.mrf.mxu0
  %v292 = vadd.f32 %v146, %v291
  %293 = vmatmul.f32.gmra.mxu0 %v217
  %v294 = vpop.f32.mrf.mxu0
  %v295 = vadd.f32 %v151, %v294
  %296 = vmatmul.f32.gmra.mxu0 %v220
  %v297 = vpop.f32.mrf.mxu0
  %v298 = vadd.f32 %v156, %v297
  %299 = vmatmul.f32.gmra.mxu0 %v223
  %v300 = vpop.f32.mrf.mxu0
  %v301 = vadd.f32 %v161, %v300
  %302 = vmatmul.f32.gmra.mxu0 %v226
  %v303 = vpop.f32.mrf.mxu0
  %v304 = vadd.f32 %v166, %v303
  %305 = vmatmul.f32.gmra.mxu0 %v229
  %v306 = vpop.f32.mrf.mxu0
  %v307 = vadd.f32 %v171, %v306
  %308 = vdwg.mxu0
  %v309 = vtanh.pop %v253
  %v310 = vtanh.pop %v256
  %v311 = vtanh.pop %v259
  %v312 = vtanh.pop %v262
  %v313 = vtanh.pop %v265
  %v314 = vtanh.pop %v268
  %v315 = vtanh.pop %v271
  %v316 = vtanh.pop %v274
  %v317 = vtanh.pop %v277
  %v318 = vtanh.pop %v280
  %v319 = vtanh.pop %v283
  %v320 = vtanh.pop %v286
  %v321 = vtanh.pop %v289
  %v322 = vtanh.pop %v292
  %v323 = vtanh.pop %v295
  %v324 = vtanh.pop %v298
  %v325 = vtanh.pop %v301
  %v326 = vtanh.pop %v304
  %v327 = vtanh.pop %v307
  %v328 = vld [vmem:[%s3] sm:$0xff]
  %v329 = vld [vmem:[%s3 + $0x8] sm:$0xff]
  %v330 = vld [vmem:[%s3 + $0x10] sm:$0xff]
  %v331 = vld [vmem:[%s3 + $0x18] sm:$0xff]
  %v332 = vld [vmem:[%s3 + $0x20] sm:$0xff]
  %v333 = vld [vmem:[%s3 + $0x28] sm:$0xff]
  %v334 = vld [vmem:[%s3 + $0x30] sm:$0xff]
  %v335 = vld [vmem:[%s3 + $0x38] sm:$0xff]
  %v336 = vld [vmem:[%s3 + $0x40] sm:$0xff]
  %v337 = vld [vmem:[%s3 + $0x48] sm:$0xff]
  %v338 = vld [vmem:[%s3 + $0x50] sm:$0xff]
  %v339 = vld [vmem:[%s3 + $0x58] sm:$0xff]
  %v340 = vld [vmem:[%s3 + $0x60] sm:$0xff]
  %v341 = vld [vmem:[%s3 + $0x68] sm:$0xff]
  %v342 = vld [vmem:[%s3 + $0x70] sm:$0xff]
  %v343 = vld [vmem:[%s3 + $0x78] sm:$0xff]
  %v344 = vld [vmem:[%s3 + $0x80] sm:$0xff]
  %v345 = vld [vmem:[%s3 + $0x88] sm:$0xff]
  %v346 = vld [vmem:[%s3 + $0x90] sm:$0xff]
  %v347 = vld [vmem:[%s3 + $0x98] sm:$0xff]
  %v348 = vld [vmem:[%s3 + $0xa0] sm:$0xff]
  %v349 = vld [vmem:[%s3 + $0xa8] sm:$0xff]
  %v350 = vld [vmem:[%s3 + $0xb0] sm:$0xff]
  %v351 = vld [vmem:[%s3 + $0xb8] sm:$0xff]
  %v352 = vld [vmem:[%s3 + $0xc0] sm:$0xff]
  %v353 = vld [vmem:[%s3 + $0xc8] sm:$0xff]
  %v354 = vld [vmem:[%s3 + $0xd0] sm:$0xff]
  %v355 = vld [vmem:[%s3 + $0xd8] sm:$0xff]
  %v356 = vld [vmem:[%s3 + $0xe0] sm:$0xff]
  %v357 = vld [vmem:[%s3 + $0xe8] sm:$0xff]
  %v358 = vld [vmem:[%s3 + $0xf0] sm:$0xff]
  %v359 = vld [vmem:[%s3 + $0xf8] sm:$0xff]
  %v360 = vld [vmem:[%s3 + $0x100] sm:$0xff]
  %v361 = vld [vmem:[%s3 + $0x108] sm:$0xff]
  %v362 = vld [vmem:[%s3 + $0x110] sm:$0xff]
  %v363 = vld [vmem:[%s3 + $0x118] sm:$0xff]
  %v364 = vld [vmem:[%s3 + $0x120] sm:$0xff]
  %v365 = vld [vmem:[%s3 + $0x128] sm:$0xff]
  %v366 = vld [vmem:[%s3 + $0x130] sm:$0xff]
  %v367 = vld [vmem:[%s3 + $0x138] sm:$0xff]
  %v368 = vld [vmem:[%s4] sm:$0xff]
  %v369 = vld [vmem:[%s4 + $0x8] sm:$0xff]
  %v370 = vld [vmem:[%s4 + $0x10] sm:$0xff]
  %v371 = vld [vmem:[%s4 + $0x18] sm:$0xff]
  %v372 = vld [vmem:[%s4 + $0x20] sm:$0xff]
  %v373 = vld [vmem:[%s4 + $0x28] sm:$0xff]
  %v374 = vld [vmem:[%s4 + $0x30] sm:$0xff]
  %v375 = vld [vmem:[%s4 + $0x38] sm:$0xff]
  %v376 = vld [vmem:[%s4 + $0x40] sm:$0xff]
  %v377 = vld [vmem:[%s4 + $0x48] sm:$0xff]
  %v378 = vld [vmem:[%s4 + $0x50] sm:$0xff]
  %v379 = vld [vmem:[%s4 + $0x58] sm:$0xff]
  %v380 = vld [vmem:[%s4 + $0x60] sm:$0xff]
  %v381 = vld [vmem:[%s4 + $0x68] sm:$0xff]
  %v382 = vld [vmem:[%s4 + $0x70] sm:$0xff]
  %v383 = vld [vmem:[%s4 + $0x78] sm:$0xff]
  %v384 = vld [vmem:[%s4 + $0x80] sm:$0xff]
  %v385 = vld [vmem:[%s4 + $0x88] sm:$0xff]
  %v386 = vld [vmem:[%s4 + $0x90] sm:$0xff]
  %v387 = vld [vmem:[%s4 + $0x98] sm:$0xff]
  %389 = vset.pattern.permute.xlu0 0
  %390 = vperm.xlu0 %389, %v368
  %v391 = vpop.permute.xlu0 %390
  %394 = vset.pattern.permute.xlu0 0
  %395 = vperm.xlu0 %394, %v369
  %v396 = vpop.permute.xlu0 %395
  %399 = vset.pattern.permute.xlu0 0
  %400 = vperm.xlu0 %399, %v370
  %v401 = vpop.permute.xlu0 %400
  %404 = vset.pattern.permute.xlu0 0
  %405 = vperm.xlu0 %404, %v371
  %v406 = vpop.permute.xlu0 %405
  %409 = vset.pattern.permute.xlu0 0
  %410 = vperm.xlu0 %409, %v372
  %v411 = vpop.permute.xlu0 %410
  %414 = vset.pattern.permute.xlu0 0
  %415 = vperm.xlu0 %414, %v373
  %v416 = vpop.permute.xlu0 %415
  %419 = vset.pattern.permute.xlu0 0
  %420 = vperm.xlu0 %419, %v374
  %v421 = vpop.permute.xlu0 %420
  %424 = vset.pattern.permute.xlu0 0
  %425 = vperm.xlu0 %424, %v375
  %v426 = vpop.permute.xlu0 %425
  %429 = vset.pattern.permute.xlu0 0
  %430 = vperm.xlu0 %429, %v376
  %v431 = vpop.permute.xlu0 %430
  %434 = vset.pattern.permute.xlu0 0
  %435 = vperm.xlu0 %434, %v377
  %v436 = vpop.permute.xlu0 %435
  %439 = vset.pattern.permute.xlu0 0
  %440 = vperm.xlu0 %439, %v378
  %v441 = vpop.permute.xlu0 %440
  %444 = vset.pattern.permute.xlu0 0
  %445 = vperm.xlu0 %444, %v379
  %v446 = vpop.permute.xlu0 %445
  %449 = vset.pattern.permute.xlu0 0
  %450 = vperm.xlu0 %449, %v380
  %v451 = vpop.permute.xlu0 %450
  %454 = vset.pattern.permute.xlu0 0
  %455 = vperm.xlu0 %454, %v381
  %v456 = vpop.permute.xlu0 %455
  %459 = vset.pattern.permute.xlu0 0
  %460 = vperm.xlu0 %459, %v382
  %v461 = vpop.permute.xlu0 %460
  %464 = vset.pattern.permute.xlu0 0
  %465 = vperm.xlu0 %464, %v383
  %v466 = vpop.permute.xlu0 %465
  %469 = vset.pattern.permute.xlu0 0
  %470 = vperm.xlu0 %469, %v384
  %v471 = vpop.permute.xlu0 %470
  %474 = vset.pattern.permute.xlu0 0
  %475 = vperm.xlu0 %474, %v385
  %v476 = vpop.permute.xlu0 %475
  %479 = vset.pattern.permute.xlu0 0
  %480 = vperm.xlu0 %479, %v386
  %v481 = vpop.permute.xlu0 %480
  %484 = vset.pattern.permute.xlu0 0
  %485 = vperm.xlu0 %484, %v387
  %v486 = vpop.permute.xlu0 %485
  %vm488 = vcmask 179200
  %v490 = vsel %vm488, %v329, 0
  %v493 = vsel %vm488, %v331, 0
  %v496 = vsel %vm488, %v333, 0
  %v499 = vsel %vm488, %v335, 0
  %v502 = vsel %vm488, %v337, 0
  %v505 = vsel %vm488, %v339, 0
  %v508 = vsel %vm488, %v341, 0
  %v511 = vsel %vm488, %v343, 0
  %v514 = vsel %vm488, %v345, 0
  %v517 = vsel %vm488, %v347, 0
  %v520 = vsel %vm488, %v349, 0
  %v523 = vsel %vm488, %v351, 0
  %v526 = vsel %vm488, %v353, 0
  %v529 = vsel %vm488, %v355, 0
  %v532 = vsel %vm488, %v357, 0
  %v535 = vsel %vm488, %v359, 0
  %v538 = vsel %vm488, %v361, 0
  %v541 = vsel %vm488, %v363, 0
  %v544 = vsel %vm488, %v365, 0
  %v547 = vsel %vm488, %v367, 0
  %v550 = vsel %vm231, %v327, 0
  %552 = vmatpush.msra.mxu0 %v324
  %553 = vmatpush.msra.mxu0 %v323
  %554 = vmatpush.msra.mxu0 %v322
  %555 = vmatpush.msra.mxu0 %v321
  %556 = vmatpush.msra.mxu0 %v320
  %557 = vmatpush.msra.mxu0 %v319
  %558 = vmatpush.msra.mxu0 %v318
  %559 = vmatpush.msra.mxu0 %v317
  %560 = vmatpush.msra.mxu0 %v316
  %561 = vmatpush.msra.mxu0 %v315
  %562 = vmatpush.msra.mxu0 %v314
  %563 = vmatpush.msra.mxu0 %v313
  %564 = vmatpush.msra.mxu0 %v312
  %565 = vmatpush.msra.mxu0 %v311
  %566 = vmatpush.msra.mxu0 %v310
  %567 = vmatpush.msra.mxu0 %v309
  %568 = vmatmul.f32.gmra.mxu0 %v328
  %v569 = vpop.f32.mrf.mxu0
  %v570 = vadd.f32 %v391, %v569
  %571 = vmatmul.f32.gmra.mxu0 %v330
  %v572 = vpop.f32.mrf.mxu0
  %v573 = vadd.f32 %v396, %v572
  %574 = vmatmul.f32.gmra.mxu0 %v332
  %v575 = vpop.f32.mrf.mxu0
  %v576 = vadd.f32 %v401, %v575
  %577 = vmatmul.f32.gmra.mxu0 %v334
  %v578 = vpop.f32.mrf.mxu0
  %v579 = vadd.f32 %v406, %v578
  %580 = vmatmul.f32.gmra.mxu0 %v336
  %v581 = vpop.f32.mrf.mxu0
  %v582 = vadd.f32 %v411, %v581
  %583 = vmatmul.f32.gmra.mxu0 %v338
  %v584 = vpop.f32.mrf.mxu0
  %v585 = vadd.f32 %v416, %v584
  %586 = vmatmul.f32.gmra.mxu0 %v340
  %v587 = vpop.f32.mrf.mxu0
  %v588 = vadd.f32 %v421, %v587
  %589 = vmatmul.f32.gmra.mxu0 %v342
  %v590 = vpop.f32.mrf.mxu0
  %v591 = vadd.f32 %v426, %v590
  %592 = vmatmul.f32.gmra.mxu0 %v344
  %v593 = vpop.f32.mrf.mxu0
  %v594 = vadd.f32 %v431, %v593
  %595 = vmatmul.f32.gmra.mxu0 %v346
  %v596 = vpop.f32.mrf.mxu0
  %v597 = vadd.f32 %v436, %v596
  %598 = vmatmul.f32.gmra.mxu0 %v348
  %v599 = vpop.f32.mrf.mxu0
  %v600 = vadd.f32 %v441, %v599
  %601 = vmatmul.f32.gmra.mxu0 %v350
  %v602 = vpop.f32.mrf.mxu0
  %v603 = vadd.f32 %v446, %v602
  %604 = vmatmul.f32.gmra.mxu0 %v352
  %v605 = vpop.f32.mrf.mxu0
  %v606 = vadd.f32 %v451, %v605
  %607 = vmatmul.f32.gmra.mxu0 %v354
  %v608 = vpop.f32.mrf.mxu0
  %v609 = vadd.f32 %v456, %v608
  %610 = vmatmul.f32.gmra.mxu0 %v356
  %v611 = vpop.f32.mrf.mxu0
  %v612 = vadd.f32 %v461, %v611
  %613 = vmatmul.f32.gmra.mxu0 %v358
  %v614 = vpop.f32.mrf.mxu0
  %v615 = vadd.f32 %v466, %v614
  %616 = vmatmul.f32.gmra.mxu0 %v360
  %v617 = vpop.f32.mrf.mxu0
  %v618 = vadd.f32 %v471, %v617
  %619 = vmatmul.f32.gmra.mxu0 %v362
  %v620 = vpop.f32.mrf.mxu0
  %v621 = vadd.f32 %v476, %v620
  %622 = vmatmul.f32.gmra.mxu0 %v364
  %v623 = vpop.f32.mrf.mxu0
  %v624 = vadd.f32 %v481, %v623
  %625 = vmatmul.f32.gmra.mxu0 %v366
  %v626 = vpop.f32.mrf.mxu0
  %v627 = vadd.f32 %v486, %v626
  %628 = vdwg.mxu0
  %629 = vmatpush.msra.mxu0 0.0
  %630 = vmatpush.msra.mxu0 0.0
  %631 = vmatpush.msra.mxu0 0.0
  %632 = vmatpush.msra.mxu0 0.0
  %633 = vmatpush.msra.mxu0 0.0
  %634 = vmatpush.msra.mxu0 0.0
  %635 = vmatpush.msra.mxu0 0.0
  %636 = vmatpush.msra.mxu0 0.0
  %637 = vmatpush.msra.mxu0 0.0
  %638 = vmatpush.msra.mxu0 0.0
  %639 = vmatpush.msra.mxu0 0.0
  %640 = vmatpush.msra.mxu0 0.0
  %641 = vmatpush.msra.mxu0 0.0
  %642 = vmatpush.msra.mxu0 %v550
  %643 = vmatpush.msra.mxu0 %v326
  %644 = vmatpush.msra.mxu0 %v325
  %645 = vmatmul.f32.gmra.mxu0 %v490
  %v646 = vpop.f32.mrf.mxu0
  %v647 = vadd.f32 %v570, %v646
  %648 = vmatmul.f32.gmra.mxu0 %v493
  %v649 = vpop.f32.mrf.mxu0
  %v650 = vadd.f32 %v573, %v649
  %651 = vmatmul.f32.gmra.mxu0 %v496
  %v652 = vpop.f32.mrf.mxu0
  %v653 = vadd.f32 %v576, %v652
  %654 = vmatmul.f32.gmra.mxu0 %v499
  %v655 = vpop.f32.mrf.mxu0
  %v656 = vadd.f32 %v579, %v655
  %657 = vmatmul.f32.gmra.mxu0 %v502
  %v658 = vpop.f32.mrf.mxu0
  %v659 = vadd.f32 %v582, %v658
  %660 = vmatmul.f32.gmra.mxu0 %v505
  %v661 = vpop.f32.mrf.mxu0
  %v662 = vadd.f32 %v585, %v661
  %663 = vmatmul.f32.gmra.mxu0 %v508
  %v664 = vpop.f32.mrf.mxu0
  %v665 = vadd.f32 %v588, %v664
  %666 = vmatmul.f32.gmra.mxu0 %v511
  %v667 = vpop.f32.mrf.mxu0
  %v668 = vadd.f32 %v591, %v667
  %669 = vmatmul.f32.gmra.mxu0 %v514
  %v670 = vpop.f32.mrf.mxu0
  %v671 = vadd.f32 %v594, %v670
  %672 = vmatmul.f32.gmra.mxu0 %v517
  %v673 = vpop.f32.mrf.mxu0
  %v674 = vadd.f32 %v597, %v673
  %675 = vmatmul.f32.gmra.mxu0 %v520
  %v676 = vpop.f32.mrf.mxu0
  %v677 = vadd.f32 %v600, %v676
  %678 = vmatmul.f32.gmra.mxu0 %v523
  %v679 = vpop.f32.mrf.mxu0
  %v680 = vadd.f32 %v603, %v679
  %681 = vmatmul.f32.gmra.mxu0 %v526
  %v682 = vpop.f32.mrf.mxu0
  %v683 = vadd.f32 %v606, %v682
  %684 = vmatmul.f32.gmra.mxu0 %v529
  %v685 = vpop.f32.mrf.mxu0
  %v686 = vadd.f32 %v609, %v685
  %687 = vmatmul.f32.gmra.mxu0 %v532
  %v688 = vpop.f32.mrf.mxu0
  %v689 = vadd.f32 %v612, %v688
  %690 = vmatmul.f32.gmra.mxu0 %v535
  %v691 = vpop.f32.mrf.mxu0
  %v692 = vadd.f32 %v615, %v691
  %693 = vmatmul.f32.gmra.mxu0 %v538
  %v694 = vpop.f32.mrf.mxu0
  %v695 = vadd.f32 %v618, %v694
  %696 = vmatmul.f32.gmra.mxu0 %v541
  %v697 = vpop.f32.mrf.mxu0
  %v698 = vadd.f32 %v621, %v697
  %699 = vmatmul.f32.gmra.mxu0 %v544
  %v700 = vpop.f32.mrf.mxu0
  %v701 = vadd.f32 %v624, %v700
  %702 = vmatmul.f32.gmra.mxu0 %v547
  %v703 = vpop.f32.mrf.mxu0
  %v704 = vadd.f32 %v627, %v703
  %705 = vdwg.mxu0
  %v706 = vtanh.pop %v647
  %v707 = vtanh.pop %v650
  %v708 = vtanh.pop %v653
  %v709 = vtanh.pop %v656
  %v710 = vtanh.pop %v659
  %v711 = vtanh.pop %v662
  %v712 = vtanh.pop %v665
  %v713 = vtanh.pop %v668
  %v714 = vtanh.pop %v671
  %v715 = vtanh.pop %v674
  %v716 = vtanh.pop %v677
  %v717 = vtanh.pop %v680
  %v718 = vtanh.pop %v683
  %v719 = vtanh.pop %v686
  %v720 = vtanh.pop %v689
  %v721 = vtanh.pop %v692
  %v722 = vtanh.pop %v695
  %v723 = vtanh.pop %v698
  %v724 = vtanh.pop %v701
  %v725 = vtanh.pop %v704
  %v726 = vld [vmem:[%s5] sm:$0xff]
  %v727 = vld [vmem:[%s5 + $0x8] sm:$0xff]
  %v728 = vld [vmem:[%s5 + $0x10] sm:$0xff]
  %v729 = vld [vmem:[%s5 + $0x18] sm:$0xff]
  %v730 = vld [vmem:[%s5 + $0x20] sm:$0xff]
  %v731 = vld [vmem:[%s5 + $0x28] sm:$0xff]
  %v732 = vld [vmem:[%s5 + $0x30] sm:$0xff]
  %v733 = vld [vmem:[%s5 + $0x38] sm:$0xff]
  %v734 = vld [vmem:[%s5 + $0x40] sm:$0xff]
  %v735 = vld [vmem:[%s5 + $0x48] sm:$0xff]
  %v736 = vld [vmem:[%s5 + $0x50] sm:$0xff]
  %v737 = vld [vmem:[%s5 + $0x58] sm:$0xff]
  %v738 = vld [vmem:[%s5 + $0x60] sm:$0xff]
  %v739 = vld [vmem:[%s5 + $0x68] sm:$0xff]
  %v740 = vld [vmem:[%s5 + $0x70] sm:$0xff]
  %v741 = vld [vmem:[%s5 + $0x78] sm:$0xff]
  %v742 = vld [vmem:[%s5 + $0x80] sm:$0xff]
  %v743 = vld [vmem:[%s5 + $0x88] sm:$0xff]
  %v744 = vld [vmem:[%s5 + $0x90] sm:$0xff]
  %v745 = vld [vmem:[%s5 + $0x98] sm:$0xff]
  %v746 = vld [vmem:[%s5 + $0xa0] sm:$0xff]
  %v747 = vld [vmem:[%s5 + $0xa8] sm:$0xff]
  %v748 = vld [vmem:[%s5 + $0xb0] sm:$0xff]
  %v749 = vld [vmem:[%s5 + $0xb8] sm:$0xff]
  %v750 = vld [vmem:[%s5 + $0xc0] sm:$0xff]
  %v751 = vld [vmem:[%s5 + $0xc8] sm:$0xff]
  %v752 = vld [vmem:[%s5 + $0xd0] sm:$0xff]
  %v753 = vld [vmem:[%s5 + $0xd8] sm:$0xff]
  %v754 = vld [vmem:[%s5 + $0xe0] sm:$0xff]
  %v755 = vld [vmem:[%s5 + $0xe8] sm:$0xff]
  %v756 = vld [vmem:[%s5 + $0xf0] sm:$0xff]
  %v757 = vld [vmem:[%s5 + $0xf8] sm:$0xff]
  %v758 = vld [vmem:[%s5 + $0x100] sm:$0xff]
  %v759 = vld [vmem:[%s5 + $0x108] sm:$0xff]
  %v760 = vld [vmem:[%s5 + $0x110] sm:$0xff]
  %v761 = vld [vmem:[%s5 + $0x118] sm:$0xff]
  %v762 = vld [vmem:[%s5 + $0x120] sm:$0xff]
  %v763 = vld [vmem:[%s5 + $0x128] sm:$0xff]
  %v764 = vld [vmem:[%s5 + $0x130] sm:$0xff]
  %v765 = vld [vmem:[%s5 + $0x138] sm:$0xff]
  %v766 = vld [vmem:[%s5 + $0x140] sm:$0xff]
  %v767 = vld [vmem:[%s5 + $0x148] sm:$0xff]
  %v768 = vld [vmem:[%s5 + $0x150] sm:$0x3]
  %v769 = vld [vmem:[%s5 + $0x158] sm:$0x3]
  %v770 = vld [vmem:[%s6] sm:$0xff]
  %v771 = vld [vmem:[%s6 + $0x8] sm:$0xff]
  %v772 = vld [vmem:[%s6 + $0x10] sm:$0xff]
  %v773 = vld [vmem:[%s6 + $0x18] sm:$0xff]
  %v774 = vld [vmem:[%s6 + $0x20] sm:$0xff]
  %v775 = vld [vmem:[%s6 + $0x28] sm:$0xff]
  %v776 = vld [vmem:[%s6 + $0x30] sm:$0xff]
  %v777 = vld [vmem:[%s6 + $0x38] sm:$0xff]
  %v778 = vld [vmem:[%s6 + $0x40] sm:$0xff]
  %v779 = vld [vmem:[%s6 + $0x48] sm:$0xff]
  %v780 = vld [vmem:[%s6 + $0x50] sm:$0xff]
  %v781 = vld [vmem:[%s6 + $0x58] sm:$0xff]
  %v782 = vld [vmem:[%s6 + $0x60] sm:$0xff]
  %v783 = vld [vmem:[%s6 + $0x68] sm:$0xff]
  %v784 = vld [vmem:[%s6 + $0x70] sm:$0xff]
  %v785 = vld [vmem:[%s6 + $0x78] sm:$0xff]
  %v786 = vld [vmem:[%s6 + $0x80] sm:$0xff]
  %v787 = vld [vmem:[%s6 + $0x88] sm:$0xff]
  %v788 = vld [vmem:[%s6 + $0x90] sm:$0xff]
  %v789 = vld [vmem:[%s6 + $0x98] sm:$0xff]
  %v790 = vld [vmem:[%s6 + $0xa0] sm:$0xff]
  %v791 = vld [vmem:[%s6 + $0xa8] sm:$0x3]
  %793 = vset.pattern.permute.xlu0 0
  %794 = vperm.xlu0 %793, %v770
  %v795 = vpop.permute.xlu0 %794
  %798 = vset.pattern.permute.xlu0 0
  %799 = vperm.xlu0 %798, %v771
  %v800 = vpop.permute.xlu0 %799
  %803 = vset.pattern.permute.xlu0 0
  %804 = vperm.xlu0 %803, %v772
  %v805 = vpop.permute.xlu0 %804
  %808 = vset.pattern.permute.xlu0 0
  %809 = vperm.xlu0 %808, %v773
  %v810 = vpop.permute.xlu0 %809
  %813 = vset.pattern.permute.xlu0 0
  %814 = vperm.xlu0 %813, %v774
  %v815 = vpop.permute.xlu0 %814
  %818 = vset.pattern.permute.xlu0 0
  %819 = vperm.xlu0 %818, %v775
  %v820 = vpop.permute.xlu0 %819
  %823 = vset.pattern.permute.xlu0 0
  %824 = vperm.xlu0 %823, %v776
  %v825 = vpop.permute.xlu0 %824
  %828 = vset.pattern.permute.xlu0 0
  %829 = vperm.xlu0 %828, %v777
  %v830 = vpop.permute.xlu0 %829
  %833 = vset.pattern.permute.xlu0 0
  %834 = vperm.xlu0 %833, %v778
  %v835 = vpop.permute.xlu0 %834
  %838 = vset.pattern.permute.xlu0 0
  %839 = vperm.xlu0 %838, %v779
  %v840 = vpop.permute.xlu0 %839
  %843 = vset.pattern.permute.xlu0 0
  %844 = vperm.xlu0 %843, %v780
  %v845 = vpop.permute.xlu0 %844
  %848 = vset.pattern.permute.xlu0 0
  %849 = vperm.xlu0 %848, %v781
  %v850 = vpop.permute.xlu0 %849
  %853 = vset.pattern.permute.xlu0 0
  %854 = vperm.xlu0 %853, %v782
  %v855 = vpop.permute.xlu0 %854
  %858 = vset.pattern.permute.xlu0 0
  %859 = vperm.xlu0 %858, %v783
  %v860 = vpop.permute.xlu0 %859
  %863 = vset.pattern.permute.xlu0 0
  %864 = vperm.xlu0 %863, %v784
  %v865 = vpop.permute.xlu0 %864
  %868 = vset.pattern.permute.xlu0 0
  %869 = vperm.xlu0 %868, %v785
  %v870 = vpop.permute.xlu0 %869
  %873 = vset.pattern.permute.xlu0 0
  %874 = vperm.xlu0 %873, %v786
  %v875 = vpop.permute.xlu0 %874
  %878 = vset.pattern.permute.xlu0 0
  %879 = vperm.xlu0 %878, %v787
  %v880 = vpop.permute.xlu0 %879
  %883 = vset.pattern.permute.xlu0 0
  %884 = vperm.xlu0 %883, %v788
  %v885 = vpop.permute.xlu0 %884
  %888 = vset.pattern.permute.xlu0 0
  %889 = vperm.xlu0 %888, %v789
  %v890 = vpop.permute.xlu0 %889
  %893 = vset.pattern.permute.xlu0 0
  %894 = vperm.xlu0 %893, %v790
  %v895 = vpop.permute.xlu0 %894
  %898 = vset.pattern.permute.xlu0 0
  %899 = vperm.xlu0 %898, %v791
  %v900 = vpop.permute.xlu0 %899
  %vm902 = vcmask 261120
  %v904 = vsel %vm902, %v727, 0
  %v907 = vsel %vm902, %v729, 0
  %v910 = vsel %vm902, %v731, 0
  %v913 = vsel %vm902, %v733, 0
  %v916 = vsel %vm902, %v735, 0
  %v919 = vsel %vm902, %v737, 0
  %v922 = vsel %vm902, %v739, 0
  %v925 = vsel %vm902, %v741, 0
  %v928 = vsel %vm902, %v743, 0
  %v931 = vsel %vm902, %v745, 0
  %v934 = vsel %vm902, %v747, 0
  %v937 = vsel %vm902, %v749, 0
  %v940 = vsel %vm902, %v751, 0
  %v943 = vsel %vm902, %v753, 0
  %v946 = vsel %vm902, %v755, 0
  %v949 = vsel %vm902, %v757, 0
  %v952 = vsel %vm902, %v759, 0
  %v955 = vsel %vm902, %v761, 0
  %v958 = vsel %vm902, %v763, 0
  %v961 = vsel %vm902, %v765, 0
  %v964 = vsel %vm902, %v767, 0
  %v967 = vsel %vm902, %v769, 0
  %969 = vmatpush.msra.mxu0 %v721
  %970 = vmatpush.msra.mxu0 %v720
  %971 = vmatpush.msra.mxu0 %v719
  %972 = vmatpush.msra.mxu0 %v718
  %973 = vmatpush.msra.mxu0 %v717
  %974 = vmatpush.msra.mxu0 %v716
  %975 = vmatpush.msra.mxu0 %v715
  %976 = vmatpush.msra.mxu0 %v714
  %977 = vmatpush.msra.mxu0 %v713
  %978 = vmatpush.msra.mxu0 %v712
  %979 = vmatpush.msra.mxu0 %v711
  %980 = vmatpush.msra.mxu0 %v710
  %981 = vmatpush.msra.mxu0 %v709
  %982 = vmatpush.msra.mxu0 %v708
  %983 = vmatpush.msra.mxu0 %v707
  %984 = vmatpush.msra.mxu0 %v706
  %985 = vmatmul.f32.gmra.mxu0 %v726
  %v986 = vpop.f32.mrf.mxu0
  %v987 = vadd.f32 %v795, %v986
  %988 = vmatmul.f32.gmra.mxu0 %v728
  %v989 = vpop.f32.mrf.mxu0
  %v990 = vadd.f32 %v800, %v989
  %991 = vmatmul.f32.gmra.mxu0 %v730
  %v992 = vpop.f32.mrf.mxu0
  %v993 = vadd.f32 %v805, %v992
  %994 = vmatmul.f32.gmra.mxu0 %v732
  %v995 = vpop.f32.mrf.mxu0
  %v996 = vadd.f32 %v810, %v995
  %997 = vmatmul.f32.gmra.mxu0 %v734
  %v998 = vpop.f32.mrf.mxu0
  %v999 = vadd.f32 %v815, %v998
  %1000 = vmatmul.f32.gmra.mxu0 %v736
  %v1001 = vpop.f32.mrf.mxu0
  %v1002 = vadd.f32 %v820, %v1001
  %1003 = vmatmul.f32.gmra.mxu0 %v738
  %v1004 = vpop.f32.mrf.mxu0
  %v1005 = vadd.f32 %v825, %v1004
  %1006 = vmatmul.f32.gmra.mxu0 %v740
  %v1007 = vpop.f32.mrf.mxu0
  %v1008 = vadd.f32 %v830, %v1007
  %1009 = vmatmul.f32.gmra.mxu0 %v742
  %v1010 = vpop.f32.mrf.mxu0
  %v1011 = vadd.f32 %v835, %v1010
  %1012 = vmatmul.f32.gmra.mxu0 %v744
  %v1013 = vpop.f32.mrf.mxu0
  %v1014 = vadd.f32 %v840, %v1013
  %1015 = vmatmul.f32.gmra.mxu0 %v746
  %v1016 = vpop.f32.mrf.mxu0
  %v1017 = vadd.f32 %v845, %v1016
  %1018 = vmatmul.f32.gmra.mxu0 %v748
  %v1019 = vpop.f32.mrf.mxu0
  %v1020 = vadd.f32 %v850, %v1019
  %1021 = vmatmul.f32.gmra.mxu0 %v750
  %v1022 = vpop.f32.mrf.mxu0
  %v1023 = vadd.f32 %v855, %v1022
  %1024 = vmatmul.f32.gmra.mxu0 %v752
  %v1025 = vpop.f32.mrf.mxu0
  %v1026 = vadd.f32 %v860, %v1025
  %1027 = vmatmul.f32.gmra.mxu0 %v754
  %v1028 = vpop.f32.mrf.mxu0
  %v1029 = vadd.f32 %v865, %v1028
  %1030 = vmatmul.f32.gmra.mxu0 %v756
  %v1031 = vpop.f32.mrf.mxu0
  %v1032 = vadd.f32 %v870, %v1031
  %1033 = vmatmul.f32.gmra.mxu0 %v758
  %v1034 = vpop.f32.mrf.mxu0
  %v1035 = vadd.f32 %v875, %v1034
  %1036 = vmatmul.f32.gmra.mxu0 %v760
  %v1037 = vpop.f32.mrf.mxu0
  %v1038 = vadd.f32 %v880, %v1037
  %1039 = vmatmul.f32.gmra.mxu0 %v762
  %v1040 = vpop.f32.mrf.mxu0
  %v1041 = vadd.f32 %v885, %v1040
  %1042 = vmatmul.f32.gmra.mxu0 %v764
  %v1043 = vpop.f32.mrf.mxu0
  %v1044 = vadd.f32 %v890, %v1043
  %1045 = vmatmul.f32.gmra.mxu0 %v766
  %v1046 = vpop.f32.mrf.mxu0
  %v1047 = vadd.f32 %v895, %v1046
  %1048 = vmatmul.f32.gmra.mxu0 %v768
  %v1049 = vpop.f32.mrf.mxu0
  %v1050 = vadd.f32 %v900, %v1049
  %1051 = vdwg.mxu0
  %1052 = vmatpush.msra.mxu0 0.0
  %1053 = vmatpush.msra.mxu0 0.0
  %1054 = vmatpush.msra.mxu0 0.0
  %1055 = vmatpush.msra.mxu0 0.0
  %1056 = vmatpush.msra.mxu0 0.0
  %1057 = vmatpush.msra.mxu0 0.0
  %1058 = vmatpush.msra.mxu0 0.0
  %1059 = vmatpush.msra.mxu0 0.0
  %1060 = vmatpush.msra.mxu0 0.0
  %1061 = vmatpush.msra.mxu0 0.0
  %1062 = vmatpush.msra.mxu0 0.0
  %1063 = vmatpush.msra.mxu0 0.0
  %1064 = vmatpush.msra.mxu0 %v725
  %1065 = vmatpush.msra.mxu0 %v724
  %1066 = vmatpush.msra.mxu0 %v723
  %1067 = vmatpush.msra.mxu0 %v722
  %1068 = vmatmul.f32.gmra.mxu0 %v904
  %v1069 = vpop.f32.mrf.mxu0
  %v1070 = vadd.f32 %v987, %v1069
  %1071 = vmatmul.f32.gmra.mxu0 %v907
  %v1072 = vpop.f32.mrf.mxu0
  %v1073 = vadd.f32 %v990, %v1072
  %1074 = vmatmul.f32.gmra.mxu0 %v910
  %v1075 = vpop.f32.mrf.mxu0
  %v1076 = vadd.f32 %v993, %v1075
  %1077 = vmatmul.f32.gmra.mxu0 %v913
  %v1078 = vpop.f32.mrf.mxu0
  %v1079 = vadd.f32 %v996, %v1078
  %1080 = vmatmul.f32.gmra.mxu0 %v916
  %v1081 = vpop.f32.mrf.mxu0
  %v1082 = vadd.f32 %v999, %v1081
  %1083 = vmatmul.f32.gmra.mxu0 %v919
  %v1084 = vpop.f32.mrf.mxu0
  %v1085 = vadd.f32 %v1002, %v1084
  %1086 = vmatmul.f32.gmra.mxu0 %v922
  %v1087 = vpop.f32.mrf.mxu0
  %v1088 = vadd.f32 %v1005, %v1087
  %1089 = vmatmul.f32.gmra.mxu0 %v925
  %v1090 = vpop.f32.mrf.mxu0
  %v1091 = vadd.f32 %v1008, %v1090
  %1092 = vmatmul.f32.gmra.mxu0 %v928
  %v1093 = vpop.f32.mrf.mxu0
  %v1094 = vadd.f32 %v1011, %v1093
  %1095 = vmatmul.f32.gmra.mxu0 %v931
  %v1096 = vpop.f32.mrf.mxu0
  %v1097 = vadd.f32 %v1014, %v1096
  %1098 = vmatmul.f32.gmra.mxu0 %v934
  %v1099 = vpop.f32.mrf.mxu0
  %v1100 = vadd.f32 %v1017, %v1099
  %1101 = vmatmul.f32.gmra.mxu0 %v937
  %v1102 = vpop.f32.mrf.mxu0
  %v1103 = vadd.f32 %v1020, %v1102
  %1104 = vmatmul.f32.gmra.mxu0 %v940
  %v1105 = vpop.f32.mrf.mxu0
  %v1106 = vadd.f32 %v1023, %v1105
  %1107 = vmatmul.f32.gmra.mxu0 %v943
  %v1108 = vpop.f32.mrf.mxu0
  %v1109 = vadd.f32 %v1026, %v1108
  %1110 = vmatmul.f32.gmra.mxu0 %v946
  %v1111 = vpop.f32.mrf.mxu0
  %v1112 = vadd.f32 %v1029, %v1111
  %1113 = vmatmul.f32.gmra.mxu0 %v949
  %v1114 = vpop.f32.mrf.mxu0
  %v1115 = vadd.f32 %v1032, %v1114
  %1116 = vmatmul.f32.gmra.mxu0 %v952
  %v1117 = vpop.f32.mrf.mxu0
  %v1118 = vadd.f32 %v1035, %v1117
  %1119 = vmatmul.f32.gmra.mxu0 %v955
  %v1120 = vpop.f32.mrf.mxu0
  %v1121 = vadd.f32 %v1038, %v1120
  %1122 = vmatmul.f32.gmra.mxu0 %v958
  %v1123 = vpop.f32.mrf.mxu0
  %v1124 = vadd.f32 %v1041, %v1123
  %1125 = vmatmul.f32.gmra.mxu0 %v961
  %v1126 = vpop.f32.mrf.mxu0
  %v1127 = vadd.f32 %v1044, %v1126
  %1128 = vmatmul.f32.gmra.mxu0 %v964
  %v1129 = vpop.f32.mrf.mxu0
  %v1130 = vadd.f32 %v1047, %v1129
  %1131 = vmatmul.f32.gmra.mxu0 %v967
  %v1132 = vpop.f32.mrf.mxu0
  %v1133 = vadd.f32 %v1050, %v1132
  %1134 = vdwg.mxu0
  %v1135 = vtanh.pop %v1070
  %v1136 = vtanh.pop %v1073
  %v1137 = vtanh.pop %v1076
  %v1138 = vtanh.pop %v1079
  %v1139 = vtanh.pop %v1082
  %v1140 = vtanh.pop %v1085
  %v1141 = vtanh.pop %v1088
  %v1142 = vtanh.pop %v1091
  %v1143 = vtanh.pop %v1094
  %v1144 = vtanh.pop %v1097
  %v1145 = vtanh.pop %v1100
  %v1146 = vtanh.pop %v1103
  %v1147 = vtanh.pop %v1106
  %v1148 = vtanh.pop %v1109
  %v1149 = vtanh.pop %v1112
  %v1150 = vtanh.pop %v1115
  %v1151 = vtanh.pop %v1118
  %v1152 = vtanh.pop %v1121
  %v1153 = vtanh.pop %v1124
  %v1154 = vtanh.pop %v1127
  %v1155 = vtanh.pop %v1130
  %v1156 = vtanh.pop %v1133
  %v1157 = vld [vmem:[%s7] sm:$0xff]
  %v1158 = vld [vmem:[%s7 + $0x8] sm:$0xff]
  %v1159 = vld [vmem:[%s7 + $0x10] sm:$0xff]
  %v1160 = vld [vmem:[%s7 + $0x18] sm:$0xff]
  %v1161 = vld [vmem:[%s7 + $0x20] sm:$0xff]
  %v1162 = vld [vmem:[%s7 + $0x28] sm:$0xff]
  %v1163 = vld [vmem:[%s7 + $0x30] sm:$0xff]
  %v1164 = vld [vmem:[%s7 + $0x38] sm:$0xff]
  %v1165 = vld [vmem:[%s7 + $0x40] sm:$0xff]
  %v1166 = vld [vmem:[%s7 + $0x48] sm:$0xff]
  %v1167 = vld [vmem:[%s7 + $0x50] sm:$0xff]
  %v1168 = vld [vmem:[%s7 + $0x58] sm:$0xff]
  %v1169 = vld [vmem:[%s7 + $0x60] sm:$0xff]
  %v1170 = vld [vmem:[%s7 + $0x68] sm:$0xff]
  %v1171 = vld [vmem:[%s7 + $0x70] sm:$0xff]
  %v1172 = vld [vmem:[%s7 + $0x78] sm:$0xff]
  %v1173 = vld [vmem:[%s7 + $0x80] sm:$0xff]
  %v1174 = vld [vmem:[%s7 + $0x88] sm:$0xff]
  %v1175 = vld [vmem:[%s7 + $0x90] sm:$0xff]
  %v1176 = vld [vmem:[%s7 + $0x98] sm:$0xff]
  %v1177 = vld [vmem:[%s7 + $0xa0] sm:$0xff]
  %v1178 = vld [vmem:[%s7 + $0xa8] sm:$0xff]
  %v1179 = vld [vmem:[%s7 + $0xb0] sm:$0xff]
  %v1180 = vld [vmem:[%s7 + $0xb8] sm:$0xff]
  %v1181 = vld [vmem:[%s7 + $0xc0] sm:$0xff]
  %v1182 = vld [vmem:[%s7 + $0xc8] sm:$0xff]
  %v1183 = vld [vmem:[%s7 + $0xd0] sm:$0xff]
  %v1184 = vld [vmem:[%s7 + $0xd8] sm:$0xff]
  %v1185 = vld [vmem:[%s7 + $0xe0] sm:$0xff]
  %v1186 = vld [vmem:[%s7 + $0xe8] sm:$0xff]
  %v1187 = vld [vmem:[%s7 + $0xf0] sm:$0xff]
  %v1188 = vld [vmem:[%s7 + $0xf8] sm:$0xff]
  %v1189 = vld [vmem:[%s7 + $0x100] sm:$0xff]
  %v1190 = vld [vmem:[%s7 + $0x108] sm:$0xff]
  %v1191 = vld [vmem:[%s7 + $0x110] sm:$0xff]
  %v1192 = vld [vmem:[%s7 + $0x118] sm:$0xff]
  %v1193 = vld [vmem:[%s7 + $0x120] sm:$0xff]
  %v1194 = vld [vmem:[%s7 + $0x128] sm:$0xff]
  %v1195 = vld [vmem:[%s7 + $0x130] sm:$0xff]
  %v1196 = vld [vmem:[%s7 + $0x138] sm:$0xff]
  %v1197 = vld [vmem:[%s7 + $0x140] sm:$0xff]
  %v1198 = vld [vmem:[%s7 + $0x148] sm:$0xff]
  %v1199 = vld [vmem:[%s7 + $0x150] sm:$0xff]
  %v1200 = vld [vmem:[%s7 + $0x158] sm:$0xff]
  %v1201 = vld [vmem:[%s7 + $0x160] sm:$0xf]
  %v1202 = vld [vmem:[%s7 + $0x168] sm:$0xf]
  %v1203 = vld [vmem:[%s8] sm:$0xff]
  %v1204 = vld [vmem:[%s8 + $0x8] sm:$0xff]
  %v1205 = vld [vmem:[%s8 + $0x10] sm:$0xff]
  %v1206 = vld [vmem:[%s8 + $0x18] sm:$0xff]
  %v1207 = vld [vmem:[%s8 + $0x20] sm:$0xff]
  %v1208 = vld [vmem:[%s8 + $0x28] sm:$0xff]
  %v1209 = vld [vmem:[%s8 + $0x30] sm:$0xff]
  %v1210 = vld [vmem:[%s8 + $0x38] sm:$0xff]
  %v1211 = vld [vmem:[%s8 + $0x40] sm:$0xff]
  %v1212 = vld [vmem:[%s8 + $0x48] sm:$0xff]
  %v1213 = vld [vmem:[%s8 + $0x50] sm:$0xff]
  %v1214 = vld [vmem:[%s8 + $0x58] sm:$0xff]
  %v1215 = vld [vmem:[%s8 + $0x60] sm:$0xff]
  %v1216 = vld [vmem:[%s8 + $0x68] sm:$0xff]
  %v1217 = vld [vmem:[%s8 + $0x70] sm:$0xff]
  %v1218 = vld [vmem:[%s8 + $0x78] sm:$0xff]
  %v1219 = vld [vmem:[%s8 + $0x80] sm:$0xff]
  %v1220 = vld [vmem:[%s8 + $0x88] sm:$0xff]
  %v1221 = vld [vmem:[%s8 + $0x90] sm:$0xff]
  %v1222 = vld [vmem:[%s8 + $0x98] sm:$0xff]
  %v1223 = vld [vmem:[%s8 + $0xa0] sm:$0xff]
  %v1224 = vld [vmem:[%s8 + $0xa8] sm:$0xff]
  %v1225 = vld [vmem:[%s8 + $0xb0] sm:$0xf]
  %1227 = vset.pattern.permute.xlu0 0
  %1228 = vperm.xlu0 %1227, %v1203
  %v1229 = vpop.permute.xlu0 %1228
  %1232 = vset.pattern.permute.xlu0 0
  %1233 = vperm.xlu0 %1232, %v1204
  %v1234 = vpop.permute.xlu0 %1233
  %1237 = vset.pattern.permute.xlu0 0
  %1238 = vperm.xlu0 %1237, %v1205
  %v1239 = vpop.permute.xlu0 %1238
  %1242 = vset.pattern.permute.xlu0 0
  %1243 = vperm.xlu0 %1242, %v1206
  %v1244 = vpop.permute.xlu0 %1243
  %1247 = vset.pattern.permute.xlu0 0
  %1248 = vperm.xlu0 %1247, %v1207
  %v1249 = vpop.permute.xlu0 %1248
  %1252 = vset.pattern.permute.xlu0 0
  %1253 = vperm.xlu0 %1252, %v1208
  %v1254 = vpop.permute.xlu0 %1253
  %1257 = vset.pattern.permute.xlu0 0
  %1258 = vperm.xlu0 %1257, %v1209
  %v1259 = vpop.permute.xlu0 %1258
  %1262 = vset.pattern.permute.xlu0 0
  %1263 = vperm.xlu0 %1262, %v1210
  %v1264 = vpop.permute.xlu0 %1263
  %1267 = vset.pattern.permute.xlu0 0
  %1268 = vperm.xlu0 %1267, %v1211
  %v1269 = vpop.permute.xlu0 %1268
  %1272 = vset.pattern.permute.xlu0 0
  %1273 = vperm.xlu0 %1272, %v1212
  %v1274 = vpop.permute.xlu0 %1273
  %1277 = vset.pattern.permute.xlu0 0
  %1278 = vperm.xlu0 %1277, %v1213
  %v1279 = vpop.permute.xlu0 %1278
  %1282 = vset.pattern.permute.xlu0 0
  %1283 = vperm.xlu0 %1282, %v1214
  %v1284 = vpop.permute.xlu0 %1283
  %1287 = vset.pattern.permute.xlu0 0
  %1288 = vperm.xlu0 %1287, %v1215
  %v1289 = vpop.permute.xlu0 %1288
  %1292 = vset.pattern.permute.xlu0 0
  %1293 = vperm.xlu0 %1292, %v1216
  %v1294 = vpop.permute.xlu0 %1293
  %1297 = vset.pattern.permute.xlu0 0
  %1298 = vperm.xlu0 %1297, %v1217
  %v1299 = vpop.permute.xlu0 %1298
  %1302 = vset.pattern.permute.xlu0 0
  %1303 = vperm.xlu0 %1302, %v1218
  %v1304 = vpop.permute.xlu0 %1303
  %1307 = vset.pattern.permute.xlu0 0
  %1308 = vperm.xlu0 %1307, %v1219
  %v1309 = vpop.permute.xlu0 %1308
  %1312 = vset.pattern.permute.xlu0 0
  %1313 = vperm.xlu0 %1312, %v1220
  %v1314 = vpop.permute.xlu0 %1313
  %1317 = vset.pattern.permute.xlu0 0
  %1318 = vperm.xlu0 %1317, %v1221
  %v1319 = vpop.permute.xlu0 %1318
  %1322 = vset.pattern.permute.xlu0 0
  %1323 = vperm.xlu0 %1322, %v1222
  %v1324 = vpop.permute.xlu0 %1323
  %1327 = vset.pattern.permute.xlu0 0
  %1328 = vperm.xlu0 %1327, %v1223
  %v1329 = vpop.permute.xlu0 %1328
  %1332 = vset.pattern.permute.xlu0 0
  %1333 = vperm.xlu0 %1332, %v1224
  %v1334 = vpop.permute.xlu0 %1333
  %1337 = vset.pattern.permute.xlu0 0
  %1338 = vperm.xlu0 %1337, %v1225
  %v1339 = vpop.permute.xlu0 %1338
  %vm1341 = vcmask 343040
  %v1343 = vsel %vm1341, %v1158, 0
  %v1346 = vsel %vm1341, %v1160, 0
  %v1349 = vsel %vm1341, %v1162, 0
  %v1352 = vsel %vm1341, %v1164, 0
  %v1355 = vsel %vm1341, %v1166, 0
  %v1358 = vsel %vm1341, %v1168, 0
  %v1361 = vsel %vm1341, %v1170, 0
  %v1364 = vsel %vm1341, %v1172, 0
  %v1367 = vsel %vm1341, %v1174, 0
  %v1370 = vsel %vm1341, %v1176, 0
  %v1373 = vsel %vm1341, %v1178, 0
  %v1376 = vsel %vm1341, %v1180, 0
  %v1379 = vsel %vm1341, %v1182, 0
  %v1382 = vsel %vm1341, %v1184, 0
  %v1385 = vsel %vm1341, %v1186, 0
  %v1388 = vsel %vm1341, %v1188, 0
  %v1391 = vsel %vm1341, %v1190, 0
  %v1394 = vsel %vm1341, %v1192, 0
  %v1397 = vsel %vm1341, %v1194, 0
  %v1400 = vsel %vm1341, %v1196, 0
  %v1403 = vsel %vm1341, %v1198, 0
  %v1406 = vsel %vm1341, %v1200, 0
  %v1409 = vsel %vm1341, %v1202, 0
  %vm1411 = vcmask 1041408
  %v1413 = vsel %vm1411, %v1156, 0
  %1415 = vmatpush.msra.mxu0 %v1150
  %1416 = vmatpush.msra.mxu0 %v1149
  %1417 = vmatpush.msra.mxu0 %v1148
  %1418 = vmatpush.msra.mxu0 %v1147
  %1419 = vmatpush.msra.mxu0 %v1146
  %1420 = vmatpush.msra.mxu0 %v1145
  %1421 = vmatpush.msra.mxu0 %v1144
  %1422 = vmatpush.msra.mxu0 %v1143
  %1423 = vmatpush.msra.mxu0 %v1142
  %1424 = vmatpush.msra.mxu0 %v1141
  %1425 = vmatpush.msra.mxu0 %v1140
  %1426 = vmatpush.msra.mxu0 %v1139
  %1427 = vmatpush.msra.mxu0 %v1138
  %1428 = vmatpush.msra.mxu0 %v1137
  %1429 = vmatpush.msra.mxu0 %v1136
  %1430 = vmatpush.msra.mxu0 %v1135
  %1431 = vmatmul.f32.gmra.mxu0 %v1157
  %v1432 = vpop.f32.mrf.mxu0
  %v1433 = vadd.f32 %v1229, %v1432
  %1434 = vmatmul.f32.gmra.mxu0 %v1159
  %v1435 = vpop.f32.mrf.mxu0
  %v1436 = vadd.f32 %v1234, %v1435
  %1437 = vmatmul.f32.gmra.mxu0 %v1161
  %v1438 = vpop.f32.mrf.mxu0
  %v1439 = vadd.f32 %v1239, %v1438
  %1440 = vmatmul.f32.gmra.mxu0 %v1163
  %v1441 = vpop.f32.mrf.mxu0
  %v1442 = vadd.f32 %v1244, %v1441
  %1443 = vmatmul.f32.gmra.mxu0 %v1165
  %v1444 = vpop.f32.mrf.mxu0
  %v1445 = vadd.f32 %v1249, %v1444
  %1446 = vmatmul.f32.gmra.mxu0 %v1167
  %v1447 = vpop.f32.mrf.mxu0
  %v1448 = vadd.f32 %v1254, %v1447
  %1449 = vmatmul.f32.gmra.mxu0 %v1169
  %v1450 = vpop.f32.mrf.mxu0
  %v1451 = vadd.f32 %v1259, %v1450
  %1452 = vmatmul.f32.gmra.mxu0 %v1171
  %v1453 = vpop.f32.mrf.mxu0
  %v1454 = vadd.f32 %v1264, %v1453
  %1455 = vmatmul.f32.gmra.mxu0 %v1173
  %v1456 = vpop.f32.mrf.mxu0
  %v1457 = vadd.f32 %v1269, %v1456
  %1458 = vmatmul.f32.gmra.mxu0 %v1175
  %v1459 = vpop.f32.mrf.mxu0
  %v1460 = vadd.f32 %v1274, %v1459
  %1461 = vmatmul.f32.gmra.mxu0 %v1177
  %v1462 = vpop.f32.mrf.mxu0
  %v1463 = vadd.f32 %v1279, %v1462
  %1464 = vmatmul.f32.gmra.mxu0 %v1179
  %v1465 = vpop.f32.mrf.mxu0
  %v1466 = vadd.f32 %v1284, %v1465
  %1467 = vmatmul.f32.gmra.mxu0 %v1181
  %v1468 = vpop.f32.mrf.mxu0
  %v1469 = vadd.f32 %v1289, %v1468
  %1470 = vmatmul.f32.gmra.mxu0 %v1183
  %v1471 = vpop.f32.mrf.mxu0
  %v1472 = vadd.f32 %v1294, %v1471
  %1473 = vmatmul.f32.gmra.mxu0 %v1185
  %v1474 = vpop.f32.mrf.mxu0
  %v1475 = vadd.f32 %v1299, %v1474
  %1476 = vmatmul.f32.gmra.mxu0 %v1187
  %v1477 = vpop.f32.mrf.mxu0
  %v1478 = vadd.f32 %v1304, %v1477
  %1479 = vmatmul.f32.gmra.mxu0 %v1189
  %v1480 = vpop.f32.mrf.mxu0
  %v1481 = vadd.f32 %v1309, %v1480
  %1482 = vmatmul.f32.gmra.mxu0 %v1191
  %v1483 = vpop.f32.mrf.mxu0
  %v1484 = vadd.f32 %v1314, %v1483
  %1485 = vmatmul.f32.gmra.mxu0 %v1193
  %v1486 = vpop.f32.mrf.mxu0
  %v1487 = vadd.f32 %v1319, %v1486
  %1488 = vmatmul.f32.gmra.mxu0 %v1195
  %v1489 = vpop.f32.mrf.mxu0
  %v1490 = vadd.f32 %v1324, %v1489
  %1491 = vmatmul.f32.gmra.mxu0 %v1197
  %v1492 = vpop.f32.mrf.mxu0
  %v1493 = vadd.f32 %v1329, %v1492
  %1494 = vmatmul.f32.gmra.mxu0 %v1199
  %v1495 = vpop.f32.mrf.mxu0
  %v1496 = vadd.f32 %v1334, %v1495
  %1497 = vmatmul.f32.gmra.mxu0 %v1201
  %v1498 = vpop.f32.mrf.mxu0
  %v1499 = vadd.f32 %v1339, %v1498
  %1500 = vdwg.mxu0
  %1501 = vmatpush.msra.mxu0 0.0
  %1502 = vmatpush.msra.mxu0 0.0
  %1503 = vmatpush.msra.mxu0 0.0
  %1504 = vmatpush.msra.mxu0 0.0
  %1505 = vmatpush.msra.mxu0 0.0
  %1506 = vmatpush.msra.mxu0 0.0
  %1507 = vmatpush.msra.mxu0 0.0
  %1508 = vmatpush.msra.mxu0 0.0
  %1509 = vmatpush.msra.mxu0 0.0
  %1510 = vmatpush.msra.mxu0 0.0
  %1511 = vmatpush.msra.mxu0 %v1413
  %1512 = vmatpush.msra.mxu0 %v1155
  %1513 = vmatpush.msra.mxu0 %v1154
  %1514 = vmatpush.msra.mxu0 %v1153
  %1515 = vmatpush.msra.mxu0 %v1152
  %1516 = vmatpush.msra.mxu0 %v1151
  %1517 = vmatmul.f32.gmra.mxu0 %v1343
  %v1518 = vpop.f32.mrf.mxu0
  %v1519 = vadd.f32 %v1433, %v1518
  %1520 = vmatmul.f32.gmra.mxu0 %v1346
  %v1521 = vpop.f32.mrf.mxu0
  %v1522 = vadd.f32 %v1436, %v1521
  %1523 = vmatmul.f32.gmra.mxu0 %v1349
  %v1524 = vpop.f32.mrf.mxu0
  %v1525 = vadd.f32 %v1439, %v1524
  %1526 = vmatmul.f32.gmra.mxu0 %v1352
  %v1527 = vpop.f32.mrf.mxu0
  %v1528 = vadd.f32 %v1442, %v1527
  %1529 = vmatmul.f32.gmra.mxu0 %v1355
  %v1530 = vpop.f32.mrf.mxu0
  %v1531 = vadd.f32 %v1445, %v1530
  %1532 = vmatmul.f32.gmra.mxu0 %v1358
  %v1533 = vpop.f32.mrf.mxu0
  %v1534 = vadd.f32 %v1448, %v1533
  %1535 = vmatmul.f32.gmra.mxu0 %v1361
  %v1536 = vpop.f32.mrf.mxu0
  %v1537 = vadd.f32 %v1451, %v1536
  %1538 = vmatmul.f32.gmra.mxu0 %v1364
  %v1539 = vpop.f32.mrf.mxu0
  %v1540 = vadd.f32 %v1454, %v1539
  %1541 = vmatmul.f32.gmra.mxu0 %v1367
  %v1542 = vpop.f32.mrf.mxu0
  %v1543 = vadd.f32 %v1457, %v1542
  %1544 = vmatmul.f32.gmra.mxu0 %v1370
  %v1545 = vpop.f32.mrf.mxu0
  %v1546 = vadd.f32 %v1460, %v1545
  %1547 = vmatmul.f32.gmra.mxu0 %v1373
  %v1548 = vpop.f32.mrf.mxu0
  %v1549 = vadd.f32 %v1463, %v1548
  %1550 = vmatmul.f32.gmra.mxu0 %v1376
  %v1551 = vpop.f32.mrf.mxu0
  %v1552 = vadd.f32 %v1466, %v1551
  %1553 = vmatmul.f32.gmra.mxu0 %v1379
  %v1554 = vpop.f32.mrf.mxu0
  %v1555 = vadd.f32 %v1469, %v1554
  %1556 = vmatmul.f32.gmra.mxu0 %v1382
  %v1557 = vpop.f32.mrf.mxu0
  %v1558 = vadd.f32 %v1472, %v1557
  %1559 = vmatmul.f32.gmra.mxu0 %v1385
  %v1560 = vpop.f32.mrf.mxu0
  %v1561 = vadd.f32 %v1475, %v1560
  %1562 = vmatmul.f32.gmra.mxu0 %v1388
  %v1563 = vpop.f32.mrf.mxu0
  %v1564 = vadd.f32 %v1478, %v1563
  %1565 = vmatmul.f32.gmra.mxu0 %v1391
  %v1566 = vpop.f32.mrf.mxu0
  %v1567 = vadd.f32 %v1481, %v1566
  %1568 = vmatmul.f32.gmra.mxu0 %v1394
  %v1569 = vpop.f32.mrf.mxu0
  %v1570 = vadd.f32 %v1484, %v1569
  %1571 = vmatmul.f32.gmra.mxu0 %v1397
  %v1572 = vpop.f32.mrf.mxu0
  %v1573 = vadd.f32 %v1487, %v1572
  %1574 = vmatmul.f32.gmra.mxu0 %v1400
  %v1575 = vpop.f32.mrf.mxu0
  %v1576 = vadd.f32 %v1490, %v1575
  %1577 = vmatmul.f32.gmra.mxu0 %v1403
  %v1578 = vpop.f32.mrf.mxu0
  %v1579 = vadd.f32 %v1493, %v1578
  %1580 = vmatmul.f32.gmra.mxu0 %v1406
  %v1581 = vpop.f32.mrf.mxu0
  %v1582 = vadd.f32 %v1496, %v1581
  %1583 = vmatmul.f32.gmra.mxu0 %v1409
  %v1584 = vpop.f32.mrf.mxu0
  %v1585 = vadd.f32 %v1499, %v1584
  %1586 = vdwg.mxu0
  %v1587 = vtanh.pop %v1519
  %v1588 = vtanh.pop %v1522
  %v1589 = vtanh.pop %v1525
  %v1590 = vtanh.pop %v1528
  %v1591 = vtanh.pop %v1531
  %v1592 = vtanh.pop %v1534
  %v1593 = vtanh.pop %v1537
  %v1594 = vtanh.pop %v1540
  %v1595 = vtanh.pop %v1543
  %v1596 = vtanh.pop %v1546
  %v1597 = vtanh.pop %v1549
  %v1598 = vtanh.pop %v1552
  %v1599 = vtanh.pop %v1555
  %v1600 = vtanh.pop %v1558
  %v1601 = vtanh.pop %v1561
  %v1602 = vtanh.pop %v1564
  %v1603 = vtanh.pop %v1567
  %v1604 = vtanh.pop %v1570
  %v1605 = vtanh.pop %v1573
  %v1606 = vtanh.pop %v1576
  %v1607 = vtanh.pop %v1579
  %v1608 = vtanh.pop %v1582
  %v1609 = vtanh.pop %v1585
  %v1610 = vld [vmem:[%s9] sm:$0xff]
  %v1611 = vld [vmem:[%s9 + $0x8] sm:$0xff]
  %v1612 = vld [vmem:[%s9 + $0x10] sm:$0xff]
  %v1613 = vld [vmem:[%s9 + $0x18] sm:$0xff]
  %v1614 = vld [vmem:[%s9 + $0x20] sm:$0x3]
  %v1615 = vld [vmem:[%s9 + $0x28] sm:$0x3]
  %v1616 = vld [vmem:[%s10] sm:$0xff]
  %v1617 = vld [vmem:[%s10 + $0x8] sm:$0xff]
  %v1618 = vld [vmem:[%s10 + $0x10] sm:$0x3]
  %1620 = vset.pattern.permute.xlu0 0
  %1621 = vperm.xlu0 %1620, %v1616
  %v1622 = vpop.permute.xlu0 %1621
  %1625 = vset.pattern.permute.xlu0 0
  %1626 = vperm.xlu0 %1625, %v1617
  %v1627 = vpop.permute.xlu0 %1626
  %1630 = vset.pattern.permute.xlu0 0
  %1631 = vperm.xlu0 %1630, %v1618
  %v1632 = vpop.permute.xlu0 %1631
  %vm1634 = vcmask 424960
  %v1636 = vsel %vm1634, %v1611, 0
  %v1639 = vsel %vm1634, %v1613, 0
  %v1642 = vsel %vm1634, %v1615, 0
  %vm1644 = vcmask 1043456
  %v1646 = vsel %vm1644, %v1609, 0
  %1648 = vmatpush.msra.mxu0 %v1602
  %1649 = vmatpush.msra.mxu0 %v1601
  %1650 = vmatpush.msra.mxu0 %v1600
  %1651 = vmatpush.msra.mxu0 %v1599
  %1652 = vmatpush.msra.mxu0 %v1598
  %1653 = vmatpush.msra.mxu0 %v1597
  %1654 = vmatpush.msra.mxu0 %v1596
  %1655 = vmatpush.msra.mxu0 %v1595
  %1656 = vmatpush.msra.mxu0 %v1594
  %1657 = vmatpush.msra.mxu0 %v1593
  %1658 = vmatpush.msra.mxu0 %v1592
  %1659 = vmatpush.msra.mxu0 %v1591
  %1660 = vmatpush.msra.mxu0 %v1590
  %1661 = vmatpush.msra.mxu0 %v1589
  %1662 = vmatpush.msra.mxu0 %v1588
  %1663 = vmatpush.msra.mxu0 %v1587
  %1664 = vmatmul.f32.gmra.mxu0 %v1610
  %v1665 = vpop.f32.mrf.mxu0
  %v1666 = vadd.f32 %v1622, %v1665
  %1667 = vmatmul.f32.gmra.mxu0 %v1612
  %v1668 = vpop.f32.mrf.mxu0
  %v1669 = vadd.f32 %v1627, %v1668
  %1670 = vmatmul.f32.gmra.mxu0 %v1614
  %v1671 = vpop.f32.mrf.mxu0
  %v1672 = vadd.f32 %v1632, %v1671
  %1673 = vdwg.mxu0
  %1674 = vmatpush.msra.mxu0 0.0
  %1675 = vmatpush.msra.mxu0 0.0
  %1676 = vmatpush.msra.mxu0 0.0
  %1677 = vmatpush.msra.mxu0 0.0
  %1678 = vmatpush.msra.mxu0 0.0
  %1679 = vmatpush.msra.mxu0 0.0
  %1680 = vmatpush.msra.mxu0 0.0
  %1681 = vmatpush.msra.mxu0 0.0
  %1682 = vmatpush.msra.mxu0 0.0
  %1683 = vmatpush.msra.mxu0 %v1646
  %1684 = vmatpush.msra.mxu0 %v1608
  %1685 = vmatpush.msra.mxu0 %v1607
  %1686 = vmatpush.msra.mxu0 %v1606
  %1687 = vmatpush.msra.mxu0 %v1605
  %1688 = vmatpush.msra.mxu0 %v1604
  %1689 = vmatpush.msra.mxu0 %v1603
  %1690 = vmatmul.f32.gmra.mxu0 %v1636
  %v1691 = vpop.f32.mrf.mxu0
  %v1692 = vadd.f32 %v1666, %v1691
  %1693 = vmatmul.f32.gmra.mxu0 %v1639
  %v1694 = vpop.f32.mrf.mxu0
  %v1695 = vadd.f32 %v1669, %v1694
  %1696 = vmatmul.f32.gmra.mxu0 %v1642
  %v1697 = vpop.f32.mrf.mxu0
  %v1698 = vadd.f32 %v1672, %v1697
  %1699 = vdwg.mxu0
  %v1700 = vtanh.pop %v1692
  %v1701 = vtanh.pop %v1695
  %v1702 = vtanh.pop %v1698
  %vm1703 = vcmask 490496
  %1704 = vst.msk [vmem:[%s11] sm:$0xff] %vm1703, %v1700
  %1705 = vst.msk [vmem:[%s11 + $0x8] sm:$0xff] %vm1703, %v1701
  %vm1706 = vcmask 484352
  %1707 = vst.msk [vmem:[%s11 + $0x10] sm:$0x3] %vm1706, %v1702
  // Predicated region
  $region46: #{cnn_rul_forward.2} parent=0 // pred_check
    _
  $region47: #{cnn_rul_forward.2} parent=0 // pred_check_branch
    %1709 = sbr.rel (0) target = $region49
  $region48: #{cnn_rul_forward.2} parent=0 // pred_region
    _
  $region49: #{cnn_rul_forward.2} parent=0 // pred_fallthru
    _
  // Predicated region
  $region50: #{cnn_rul_forward.2} parent=0 // pred_check
    _
  $region51: #{cnn_rul_forward.2} parent=0 // pred_check_branch
    %1711 = sbr.rel (0) target = $region53
  $region52: #{cnn_rul_forward.2} parent=0 // pred_region
    _
  $region53: #{cnn_rul_forward.2} parent=0 // pred_fallthru
    _

</llo_original>
